<compile_context>
chip_gen: v5e
topology: v5e:2x2
jax: 0.10.0
libtpu: 0.0.40
codegen_flags: <defaults>
</compile_context>

<pallas_src>
import functools

import jax
import jax.numpy as jnp
from jax import lax
from jax.experimental import pallas as pl
from jax.experimental.pallas import tpu as pltpu


def _pick_tile(n, cap, multiple):
    """Largest tile <= cap that divides n and is a multiple of `multiple`.

    Falls back to the full extent n (always layout-legal) if no such divisor
    exists or n <= cap.
    """
    if n <= cap:
        return n
    t = (cap // multiple) * multiple
    while t >= multiple:
        if n % t == 0:
            return t
        t -= multiple
    # TODO(synk): pad N to a multiple of 128 with a masked kv tail instead of
    # falling back to the full extent for awkward N.
    return n


def _vmem_limit_bytes():
    """Generation-aware scoped-VMEM request (~80% of physical, with fallback)."""
    try:
        cap = int(pltpu.get_tpu_info().vmem_capacity_bytes)
        return int(cap * 0.8)          # ~51 MiB on v7x, ~102 MiB on v5e/v6e
    except Exception:
        return 48 * 1024 * 1024        # safe on every generation


def _stage2_vmem_bytes(tq, tk, c, c8, cbytes):
    """Rough stage-2 VMEM footprint (double-buffered inputs + scratch + scores)."""
    in_bytes = 2 * (tq * c * 4            # x tile (f32)
                    + tq * c8 * cbytes    # q tile
                    + c8 * tk * cbytes    # k^T tile
                    + tk * c * cbytes)    # v tile
    out_bytes = 2 * tq * c * 4
    scratch = (2 * tq + tq * c) * 4
    score = 3 * tq * tk * 4               # s, p and temporaries (f32)
    return in_bytes + out_bytes + scratch + score


# --------------------------------------------------------------------------
# Stage 1: fused Q/K/V 1x1-conv projections (one wide matmul per x tile).
# --------------------------------------------------------------------------
def _qkv_proj_kernel(x_ref, w_ref, b_ref, q_ref, kt_ref, v_ref, *,
                     c8, compute_dtype):
    # x_ref: (1, tn, C); 1x1 convs == per-pixel matmuls over channels.
    x = x_ref[0].astype(compute_dtype)                       # (tn, C)
    qkv = lax.dot_general(x, w_ref[...], (((1,), (0,)), ((), ())),
                          preferred_element_type=jnp.float32) + b_ref[...]
    q = qkv[:, :c8]                                          # (tn, C8)
    k = qkv[:, c8:2 * c8]                                    # (tn, C8)
    v = qkv[:, 2 * c8:]                                      # (tn, C)
    q_ref[0] = q.astype(q_ref.dtype)
    # Lane-dense transposed K: (C8, tn).  One-time XLU transpose per tile.
    kt_ref[0] = jnp.transpose(k).astype(kt_ref.dtype)
    v_ref[0] = v.astype(v_ref.dtype)


# --------------------------------------------------------------------------
# Stage 2: flash-style position attention + residual.
# --------------------------------------------------------------------------
def _pam_flash_kernel(x_ref, q_ref, kt_ref, v_ref, gamma_ref, o_ref,
                      m_scr, l_scr, acc_scr, *, compute_dtype):
    ki = pl.program_id(2)

    @pl.when(ki == 0)
    def _init():
        m_scr[...] = jnp.full_like(m_scr, -jnp.inf)
        l_scr[...] = jnp.zeros_like(l_scr)
        acc_scr[...] = jnp.zeros_like(acc_scr)

    # energy[i, j] = <q_i, k_j>; canonical (tq, C8) x (C8, tk) contraction.
    s = lax.dot_general(q_ref[0], kt_ref[0],
                        dimension_numbers=(((1,), (0,)), ((), ())),
                        preferred_element_type=jnp.float32)      # (tq, tk)

    # Online softmax update.
    m_prev = m_scr[...]
    m_new = jnp.maximum(m_prev, jnp.max(s, axis=-1, keepdims=True))
    alpha = jnp.exp(m_prev - m_new)
    p = jnp.exp(s - m_new)
    l_scr[...] = alpha * l_scr[...] + jnp.sum(p, axis=-1, keepdims=True)
    acc_scr[...] = alpha * acc_scr[...] + lax.dot_general(
        p.astype(compute_dtype), v_ref[0],
        dimension_numbers=(((1,), (0,)), ((), ())),
        preferred_element_type=jnp.float32)                      # (tq, C)
    m_scr[...] = m_new

    @pl.when(ki == pl.num_programs(2) - 1)
    def _finalize():
        inv_l = pl.reciprocal(l_scr[...], approx=False)
        gamma = gamma_ref[0, 0]
        o_ref[0] = (gamma * (acc_scr[...] * inv_l)
                    + x_ref[0].astype(jnp.float32)).astype(o_ref.dtype)


def pam_module_pallas(x_nchw, wq, bq, wk, bk, wv, bv, gamma, *,
                      tq=512, tk=512, tn=1024, compute_dtype=jnp.bfloat16):
    """PAM_Module forward.

    x_nchw : (B, C, H, W) float32
    wq, wk : (C, C//8)  1x1-conv weights stored as (in, out) matrices
    bq, bk : (C//8,)
    wv     : (C, C)
    bv     : (C,)
    gamma  : scalar
    returns (B, C, H, W) float32
    """
    B, C, H, W = x_nchw.shape
    N = H * W
    C8 = wq.shape[1]
    Ctot = 2 * C8 + C
    cbytes = jnp.dtype(compute_dtype).itemsize

    # Tile selection: tq is a sublane dim (multiple of 8); tk / tn land on the
    # lane dim of the transposed-K blocks, so they must be multiples of 128
    # (or the full extent N).
    tq = _pick_tile(N, tq, 8)
    tk = _pick_tile(N, tk, 128)
    tn = _pick_tile(N, tn, 128)
    assert N % tq == 0 and N % tk == 0 and N % tn == 0

    vmem_limit = _vmem_limit_bytes()
    est = _stage2_vmem_bytes(tq, tk, C, C8, cbytes)
    if est > int(0.9 * vmem_limit):
        raise ValueError(
            f"Stage-2 tiles (tq={tq}, tk={tk}) need ~{est >> 20} MiB of VMEM "
            f"which exceeds the ~{vmem_limit >> 20} MiB budget; pass smaller "
            f"tq/tk (N={N} may need padding to a multiple of 128).")

    # NCHW -> (B, N, C) channels-last flattened spatial (glue outside kernel).
    x_bnc = jnp.transpose(x_nchw.reshape(B, C, N), (0, 2, 1)).astype(jnp.float32)

    # Concatenated projection weights / biases: one wide matmul in stage 1.
    w_cat = jnp.concatenate([wq, wk, wv], axis=1).astype(compute_dtype)   # (C, Ctot)
    b_cat = jnp.concatenate([bq, bk, bv]).reshape(1, Ctot).astype(jnp.float32)
    gamma2 = jnp.asarray(gamma, jnp.float32).reshape(1, 1)

    # ---- Stage 1: fused Q / K^T / V projections, once per position. ----
    q_bnc, kt_bcn, v_bnc = pl.pallas_call(
        functools.partial(_qkv_proj_kernel, c8=C8, compute_dtype=compute_dtype),
        out_shape=(jax.ShapeDtypeStruct((B, N, C8), compute_dtype),
                   jax.ShapeDtypeStruct((B, C8, N), compute_dtype),
                   jax.ShapeDtypeStruct((B, N, C), compute_dtype)),
        grid_spec=pltpu.PrefetchScalarGridSpec(
            num_scalar_prefetch=0,
            grid=(B, N // tn),
            in_specs=[
                pl.BlockSpec((1, tn, C), lambda b, n: (b, n, 0)),     # x
                pl.BlockSpec((C, Ctot), lambda b, n: (0, 0)),         # [wq|wk|wv]
                pl.BlockSpec((1, Ctot), lambda b, n: (0, 0)),         # [bq|bk|bv]
            ],
            out_specs=(pl.BlockSpec((1, tn, C8), lambda b, n: (b, n, 0)),   # Q
                       pl.BlockSpec((1, C8, tn), lambda b, n: (b, 0, n)),   # K^T
                       pl.BlockSpec((1, tn, C), lambda b, n: (b, n, 0))),   # V
        ),
        compiler_params=pltpu.CompilerParams(
            dimension_semantics=("parallel", "parallel"),
            vmem_limit_bytes=vmem_limit),
    )(x_bnc, w_cat, b_cat)

    # ---- Stage 2: flash-style position attention + residual. ----
    out_bnc = pl.pallas_call(
        functools.partial(_pam_flash_kernel, compute_dtype=compute_dtype),
        out_shape=jax.ShapeDtypeStruct((B, N, C), jnp.float32),
        grid_spec=pltpu.PrefetchScalarGridSpec(
            num_scalar_prefetch=0,
            grid=(B, N // tq, N // tk),
            in_specs=[
                pl.BlockSpec((1, tq, C), lambda b, qi, ki: (b, qi, 0)),    # x
                pl.BlockSpec((1, tq, C8), lambda b, qi, ki: (b, qi, 0)),   # Q
                pl.BlockSpec((1, C8, tk), lambda b, qi, ki: (b, 0, ki)),   # K^T
                pl.BlockSpec((1, tk, C), lambda b, qi, ki: (b, ki, 0)),    # V
                pl.BlockSpec(memory_space=pltpu.MemorySpace.SMEM),         # gamma
            ],
            out_specs=pl.BlockSpec((1, tq, C), lambda b, qi, ki: (b, qi, 0)),
            scratch_shapes=[
                pltpu.VMEM((tq, 1), jnp.float32),       # running max m
                pltpu.VMEM((tq, 1), jnp.float32),       # running sum l
                pltpu.VMEM((tq, C), jnp.float32),       # output accumulator
            ],
        ),
        compiler_params=pltpu.CompilerParams(
            dimension_semantics=("parallel", "parallel", "arbitrary"),
            vmem_limit_bytes=vmem_limit),
    )(x_bnc, q_bnc, kt_bcn, v_bnc, gamma2)

    # (B, N, C) -> NCHW
    return jnp.transpose(out_bnc, (0, 2, 1)).reshape(B, C, H, W)


def pam_module_ref(x_nchw, wq, bq, wk, bk, wv, bv, gamma):
    """Pure-JAX f32 reference mirroring the PyTorch forward (NCHW semantics)."""
    B, C, H, W = x_nchw.shape
    N = H * W
    x_flat = x_nchw.reshape(B, C, N)                                   # (B, C, N)
    q = jnp.einsum('oc,bcn->bon', wq.T, x_flat) + bq[None, :, None]    # (B, C8, N)
    k = jnp.einsum('oc,bcn->bon', wk.T, x_flat) + bk[None, :, None]    # (B, C8, N)
    v = jnp.einsum('oc,bcn->bon', wv.T, x_flat) + bv[None, :, None]    # (B, C, N)
    proj_query = jnp.transpose(q, (0, 2, 1))                           # (B, N, C8)
    energy = jnp.einsum('bik,bkj->bij', proj_query, k)                 # (B, N, N)
    attention = jax.nn.softmax(energy, axis=-1)
    out = jnp.einsum('bcn,bin->bci', v, attention)                     # (B, C, N)
    out = out.reshape(B, C, H, W)
    return gamma * out + x_nchw


if __name__ == "__main__":
    # Small shapes consistent with the module (C divisible by 8).
    # N = 1024 so the default tq=tk=512 tiling exercises a (2, 2, 2) grid
    # (multi-q-tile + multi-kv-step online softmax).
    B, C, H, W = 2, 32, 32, 32
    C8 = C // 8

    key = jax.random.PRNGKey(0)
    kx, kwq, kbq, kwk, kbk, kwv, kbv = jax.random.split(key, 7)

    x = jax.random.normal(kx, (B, C, H, W), dtype=jnp.float32)
    wq = 0.1 * jax.random.normal(kwq, (C, C8), dtype=jnp.float32)
    bq = 0.1 * jax.random.normal(kbq, (C8,), dtype=jnp.float32)
    wk = 0.1 * jax.random.normal(kwk, (C, C8), dtype=jnp.float32)
    bk = 0.1 * jax.random.normal(kbk, (C8,), dtype=jnp.float32)
    wv = 0.1 * jax.random.normal(kwv, (C, C), dtype=jnp.float32)
    bv = 0.1 * jax.random.normal(kbv, (C,), dtype=jnp.float32)
    # nn.Parameter(torch.zeros(1)) -> gamma init is 0; use a nonzero value so
    # the attention path actually contributes to the checked output.
    gamma = jnp.float32(0.5)

    ref = pam_module_ref(x, wq, bq, wk, bk, wv, bv, gamma)

    # Exact-algorithm check with f32 compute, default (large) tiles.
    out_f32 = pam_module_pallas(x, wq, bq, wk, bk, wv, bv, gamma,
                                compute_dtype=jnp.float32)
    # Fast path: bf16 MXU inputs, f32 accumulation (default tiles).
    out_bf16 = pam_module_pallas(x, wq, bq, wk, bk, wv, bv, gamma)
    # Smaller explicit tiles: exercises many kv steps of the online softmax.
    out_small = pam_module_pallas(x, wq, bq, wk, bk, wv, bv, gamma,
                                  tq=256, tk=128, tn=512)
    out_f32, out_bf16, out_small = jax.block_until_ready(
        (out_f32, out_bf16, out_small))

    assert out_f32.shape == (B, C, H, W)
    assert out_bf16.shape == (B, C, H, W)
    assert out_small.shape == (B, C, H, W)
    err_f32 = float(jnp.max(jnp.abs(out_f32 - ref)))
    err_bf16 = float(jnp.max(jnp.abs(out_bf16 - ref)))
    err_small = float(jnp.max(jnp.abs(out_small - ref)))
    assert err_f32 < 2e-3, err_f32      # f32 compute: only flash reassociation
    assert err_bf16 < 8e-2, err_bf16    # bf16-input / f32-accumulate tolerance
    assert err_small < 8e-2, err_small

    print("KERNEL_OK")
</pallas_src>

<mosaic_0001>
module attributes {stable_mosaic.version = 11 : i64} {
  func.func @_qkv_proj_kernel(%arg0: i32, %arg1: i32, %arg2: memref<1x1024x32xf32, #tpu.memory_space<vmem>>, %arg3: memref<32x40xf32, #tpu.memory_space<vmem>>, %arg4: memref<1x40xf32, #tpu.memory_space<vmem>>, %arg5: memref<1x1024x4xf32, #tpu.memory_space<vmem>>, %arg6: memref<1x4x1024xf32, #tpu.memory_space<vmem>>, %arg7: memref<1x1024x32xf32, #tpu.memory_space<vmem>>) attributes {dimension_semantics = [#tpu.dimension_semantics<parallel>, #tpu.dimension_semantics<parallel>], iteration_bounds = array<i64: 2, 1>, scalar_prefetch = 0 : i64, scratch_operands = 0 : i64, tpu.core_type = #tpu.core_type<tc>, window_params = [{transform_indices = @transform_0, window_bounds = array<i64: 1, 1024, 32>}, {pipeline_mode = #tpu.pipeline_mode<synchronous>, transform_indices = @transform_1, window_bounds = array<i64: 32, 40>}, {pipeline_mode = #tpu.pipeline_mode<synchronous>, transform_indices = @transform_2, window_bounds = array<i64: 1, 40>}, {transform_indices = @transform_3, window_bounds = array<i64: 1, 1024, 4>}, {transform_indices = @transform_4, window_bounds = array<i64: 1, 4, 1024>}, {transform_indices = @transform_5, window_bounds = array<i64: 1, 1024, 32>}]} {
    %c0 = arith.constant 0 : index
    %c0_0 = arith.constant 0 : index
    %c0_1 = arith.constant 0 : index
    %0 = vector.load %arg2[%c0, %c0_0, %c0_1] : memref<1x1024x32xf32, #tpu.memory_space<vmem>>, vector<1x1024x32xf32>
    %1 = vector.shape_cast %0 : vector<1x1024x32xf32> to vector<1024x32xf32>
    %c0_2 = arith.constant 0 : index
    %c0_3 = arith.constant 0 : index
    %2 = vector.load %arg3[%c0_2, %c0_3] : memref<32x40xf32, #tpu.memory_space<vmem>>, vector<32x40xf32>
    %cst = arith.constant dense<0.000000e+00> : vector<1024x40xf32>
    %3 = tpu.matmul %1, %2, %cst {dimension_numbers = #tpu.dot_dimension_numbers<[1], [0], [0], [1], [0, 0, 1, 1], [], []>} : vector<1024x32xf32>, vector<32x40xf32>, vector<1024x40xf32> -> vector<1024x40xf32>
    %c0_4 = arith.constant 0 : index
    %c0_5 = arith.constant 0 : index
    %4 = vector.load %arg4[%c0_4, %c0_5] : memref<1x40xf32, #tpu.memory_space<vmem>>, vector<1x40xf32>
    %5 = vector.broadcast %4 : vector<1x40xf32> to vector<1024x40xf32>
    %6 = arith.addf %3, %5 : vector<1024x40xf32>
    %7 = vector.extract_strided_slice %6 {offsets = [0, 0], sizes = [1024, 4], strides = [1, 1]} : vector<1024x40xf32> to vector<1024x4xf32>
    %8 = vector.extract_strided_slice %6 {offsets = [0, 4], sizes = [1024, 4], strides = [1, 1]} : vector<1024x40xf32> to vector<1024x4xf32>
    %9 = vector.extract_strided_slice %6 {offsets = [0, 8], sizes = [1024, 32], strides = [1, 1]} : vector<1024x40xf32> to vector<1024x32xf32>
    %c0_6 = arith.constant 0 : index
    %c0_7 = arith.constant 0 : index
    %c0_8 = arith.constant 0 : index
    %10 = vector.load %arg5[%c0_6, %c0_7, %c0_8] : memref<1x1024x4xf32, #tpu.memory_space<vmem>>, vector<1x1024x4xf32>
    %11 = vector.shape_cast %10 : vector<1x1024x4xf32> to vector<1024x4xf32>
    %12 = vector.shape_cast %7 : vector<1024x4xf32> to vector<1x1024x4xf32>
    tpu.vector_store %arg5[%c0_6, %c0_7, %c0_8], %12 {strides = array<i32>} : memref<1x1024x4xf32, #tpu.memory_space<vmem>>, vector<1x1024x4xf32>,
    %13 = tpu.transpose %8, [1, 0] : vector<1024x4xf32> -> vector<4x1024xf32>
    %c0_9 = arith.constant 0 : index
    %c0_10 = arith.constant 0 : index
    %c0_11 = arith.constant 0 : index
    %14 = vector.load %arg6[%c0_9, %c0_10, %c0_11] : memref<1x4x1024xf32, #tpu.memory_space<vmem>>, vector<1x4x1024xf32>
    %15 = vector.shape_cast %14 : vector<1x4x1024xf32> to vector<4x1024xf32>
    %16 = vector.shape_cast %13 : vector<4x1024xf32> to vector<1x4x1024xf32>
    tpu.vector_store %arg6[%c0_9, %c0_10, %c0_11], %16 {strides = array<i32>} : memref<1x4x1024xf32, #tpu.memory_space<vmem>>, vector<1x4x1024xf32>,
    %c0_12 = arith.constant 0 : index
    %c0_13 = arith.constant 0 : index
    %c0_14 = arith.constant 0 : index
    %17 = vector.load %arg7[%c0_12, %c0_13, %c0_14] : memref<1x1024x32xf32, #tpu.memory_space<vmem>>, vector<1x1024x32xf32>
    %18 = vector.shape_cast %17 : vector<1x1024x32xf32> to vector<1024x32xf32>
    %19 = vector.shape_cast %9 : vector<1024x32xf32> to vector<1x1024x32xf32>
    tpu.vector_store %arg7[%c0_12, %c0_13, %c0_14], %19 {strides = array<i32>} : memref<1x1024x32xf32, #tpu.memory_space<vmem>>, vector<1x1024x32xf32>,
    return
  }
  func.func @transform_0(%arg0: i32, %arg1: i32) -> (i32, i32, i32) {
    %c0_i32 = arith.constant 0 : i32
    %c0_i32_0 = arith.constant 0 : i32
    return %arg0, %arg1, %c0_i32 : i32, i32, i32
  }
  func.func @transform_1(%arg0: i32, %arg1: i32) -> (i32, i32) {
    %c0_i32 = arith.constant 0 : i32
    %c0_i32_0 = arith.constant 0 : i32
    %c0_i32_1 = arith.constant 0 : i32
    return %c0_i32, %c0_i32_0 : i32, i32
  }
  func.func @transform_2(%arg0: i32, %arg1: i32) -> (i32, i32) {
    %c0_i32 = arith.constant 0 : i32
    %c0_i32_0 = arith.constant 0 : i32
    %c0_i32_1 = arith.constant 0 : i32
    return %c0_i32, %c0_i32_0 : i32, i32
  }
  func.func @transform_3(%arg0: i32, %arg1: i32) -> (i32, i32, i32) {
    %c0_i32 = arith.constant 0 : i32
    %c0_i32_0 = arith.constant 0 : i32
    return %arg0, %arg1, %c0_i32 : i32, i32, i32
  }
  func.func @transform_4(%arg0: i32, %arg1: i32) -> (i32, i32, i32) {
    %c0_i32 = arith.constant 0 : i32
    %c0_i32_0 = arith.constant 0 : i32
    return %arg0, %c0_i32, %arg1 : i32, i32, i32
  }
  func.func @transform_5(%arg0: i32, %arg1: i32) -> (i32, i32, i32) {
    %c0_i32 = arith.constant 0 : i32
    %c0_i32_0 = arith.constant 0 : i32
    return %arg0, %arg1, %c0_i32 : i32, i32, i32
  }
}

</mosaic_0001>

<llo_original>
// kernel: tpu_custom_call.1
$region0: #{tpu_custom_call.1}
  #allocation0 [shape = 'u32[]', space=smem, size = 0x4, offset = 0x4, fixed_abs, tag = 'smem constant byte address 0x4 - core index']
  #allocation1 [shape = 'u32[72,128]{1,0:T(1,128)}', space=vmem, size = 0x9000, scoped, tag = 'internal scratch']
  %s0 = inlined_call_operand.vmem [shape: f32[2,1024,32], index: 0, kind: input, shape index: {}]
  %s1 = inlined_call_operand.vmem [shape: f32[32,40], index: 1, kind: input, shape index: {}]
  %s2 = inlined_call_operand.vmem [shape: f32[1,40], index: 2, kind: input, shape index: {}]
  %s3 = inlined_call_operand.vmem [shape: f32[2,1024,4], index: 3, kind: output, shape index: {0}]
  %s4 = inlined_call_operand.hbm [shape: f32[2,4,1024], index: 4, kind: output, shape index: {1}]
  %s5 = inlined_call_operand.vmem [shape: f32[2,1024,32], index: 5, kind: output, shape index: {2}]
  %6 = xla_tuple %s3, %s4, %s5
  %s7 = sld [smem:[#allocation0]]
  $region61: #{tpu_custom_call.1} parent=0
    _
  %s9 = ssub.s32 1, %s7
  %s10 = scalar_select 0, %s9, %s7
  $region1: #{tpu_custom_call.1} parent=0
    #allocation2 [shape = 'u8[32768]{0}', space=vmem, size = 0x8000, scoped, tag = 'output window, operand 1']
    #allocation3 [shape = 's32[2]{0}', space=sflag, size = 0x8, scoped, tag = 'scoped memory for tpu_custom_call.1']
    %11 = vsyncpa [#allocation3], 0
    %s12 = scalar_lea.sflag [#allocation3], 1
    %13 = vsyncpa %s12, 0
    loop: start=0, step=1, limit=4
    $region2: #{tpu_custom_call.1} parent=1 // loop_pre_header
      _
    $region3: #{tpu_custom_call.1} parent=1 // loop_header
      %s15 = sphi 0, %s19
      %p16 = scmp.ge.s32.totalorder %s15, 4
      %s22 = sphi 0, %s34
      %s23 = sphi 0, %s30
      %s24 = sphi 0, %s22
      %s25 = sphi 0, %s23
      %s26 = sphi 0, %s24
      %s27 = sphi 0, %s25
      %s39 = sphi 0, %s41
      %s42 = sphi 0, %s39
      %s43 = sphi 0, %s42
      %s59 = sphi 0, %s43
      %s63 = sphi 0, %s63
      %s65 = sphi 0, %s63
      %s66 = sphi 0, %s65
      %s80 = sphi 0, %s66
      %s84 = sphi 0, %s84
      %s86 = sphi 0, %s84
      %s87 = sphi 0, %s86
      %s101 = sphi 0, %s87
      %s109 = sphi 0, %s111
      %s112 = sphi 0, %s109
      %s113 = sphi 0, %s112
      %s129 = sphi 0, %s113
      %s137 = sphi 0, %s139
      %s140 = sphi 0, %s137
      %s141 = sphi 0, %s140
      %s157 = sphi 0, %s141
      %s165 = sphi 0, %s167
      %s168 = sphi 0, %s165
      %s169 = sphi 0, %s168
      %s185 = sphi 0, %s169
    $region4: #{tpu_custom_call.1} parent=1 // loop_header_branch
      %18 = sbr.rel (%p16) target = $region8
    $region5: #{tpu_custom_call.1} parent=1 // loop_body
      %s20 = ssub.s32 %s15, 1
      %s21 = ssub.s32 %s15, 2
      %s28 = sadd.s32 1, %s23
      %p29 = scmp.ge.s32.totalorder %s28, 1
      %s30 = scalar_select %p29, 0, %s28
      %s31 = sadd.s32 1, %s22
      %s32 = scalar_select %p29, %s31, %s22
      %p33 = scmp.ge.s32.totalorder %s32, 2
      %s34 = scalar_select %p33, 0, %s32
      %s35 = ssub.s32 %s22, %s34
      %s36 = ssub.s32 %s23, %s30
      %s37 = sor.u32 %s35, %s36
      %p38 = scmp.eq.s32.totalorder %s37, 0
      %s40 = sadd.s32 %s39, 1
      %s41 = scalar_select %p38, %s39, %s40
      %p44 = pneg %p38
      %p45 = scmp.eq.s32.totalorder %s15, 1
      %p46 = por %p44, %p45
      %p47 = scmp.ne.s32.totalorder %s39, %s42
      %p48 = scmp.eq.s32.totalorder %s15, 0
      %p49 = por %p47, %p48
      %p50 = scmp.ne.s32.totalorder %s39, %s42
      %p51 = scmp.eq.s32.totalorder %s20, 1
      %p52 = por %p50, %p51
      %p53 = scmp.ne.s32.totalorder %s42, %s43
      %p54 = scmp.eq.s32.totalorder %s20, 0
      %p55 = por %p53, %p54
      %p56 = scmp.ne.s32.totalorder %s42, %s43
      %p57 = scmp.eq.s32.totalorder %s21, 1
      %p58 = por %p56, %p57
      %p60 = scmp.ne.s32.totalorder %s43, %s59
      %p61 = scmp.eq.s32.totalorder %s21, 0
      %p62 = por %p60, %p61
      %s64 = sadd.s32 %s63, 1
      %p67 = scmp.eq.s32.totalorder %s15, 1
      %p68 = scmp.ne.s32.totalorder %s63, %s65
      %p69 = scmp.eq.s32.totalorder %s15, 0
      %p70 = por %p68, %p69
      %p71 = scmp.ne.s32.totalorder %s63, %s65
      %p72 = scmp.eq.s32.totalorder %s20, 1
      %p73 = por %p71, %p72
      %p74 = scmp.ne.s32.totalorder %s65, %s66
      %p75 = scmp.eq.s32.totalorder %s20, 0
      %p76 = por %p74, %p75
      %p77 = scmp.ne.s32.totalorder %s65, %s66
      %p78 = scmp.eq.s32.totalorder %s21, 1
      %p79 = por %p77, %p78
      %p81 = scmp.ne.s32.totalorder %s66, %s80
      %p82 = scmp.eq.s32.totalorder %s21, 0
      %p83 = por %p81, %p82
      %s85 = sadd.s32 %s84, 1
      %p88 = scmp.eq.s32.totalorder %s15, 1
      %p89 = scmp.ne.s32.totalorder %s84, %s86
      %p90 = scmp.eq.s32.totalorder %s15, 0
      %p91 = por %p89, %p90
      %p92 = scmp.ne.s32.totalorder %s84, %s86
      %p93 = scmp.eq.s32.totalorder %s20, 1
      %p94 = por %p92, %p93
      %p95 = scmp.ne.s32.totalorder %s86, %s87
      %p96 = scmp.eq.s32.totalorder %s20, 0
      %p97 = por %p95, %p96
      %p98 = scmp.ne.s32.totalorder %s86, %s87
      %p99 = scmp.eq.s32.totalorder %s21, 1
      %p100 = por %p98, %p99
      %p102 = scmp.ne.s32.totalorder %s87, %s101
      %p103 = scmp.eq.s32.totalorder %s21, 0
      %p104 = por %p102, %p103
      %s105 = ssub.s32 %s22, %s34
      %s106 = ssub.s32 %s23, %s30
      %s107 = sor.u32 %s105, %s106
      %p108 = scmp.eq.s32.totalorder %s107, 0
      %s110 = sadd.s32 %s109, 1
      %s111 = scalar_select %p108, %s109, %s110
      %p114 = pneg %p108
      %p115 = scmp.eq.s32.totalorder %s15, 1
      %p116 = por %p114, %p115
      %p117 = scmp.ne.s32.totalorder %s109, %s112
      %p118 = scmp.eq.s32.totalorder %s15, 0
      %p119 = por %p117, %p118
      %p120 = scmp.ne.s32.totalorder %s109, %s112
      %p121 = scmp.eq.s32.totalorder %s20, 1
      %p122 = por %p120, %p121
      %p123 = scmp.ne.s32.totalorder %s112, %s113
      %p124 = scmp.eq.s32.totalorder %s20, 0
      %p125 = por %p123, %p124
      %p126 = scmp.ne.s32.totalorder %s112, %s113
      %p127 = scmp.eq.s32.totalorder %s21, 1
      %p128 = por %p126, %p127
      %p130 = scmp.ne.s32.totalorder %s113, %s129
      %p131 = scmp.eq.s32.totalorder %s21, 0
      %p132 = por %p130, %p131
      %s133 = ssub.s32 %s22, %s34
      %s134 = ssub.s32 %s23, %s30
      %s135 = sor.u32 %s133, %s134
      %p136 = scmp.eq.s32.totalorder %s135, 0
      %s138 = sadd.s32 %s137, 1
      %s139 = scalar_select %p136, %s137, %s138
      %p142 = pneg %p136
      %p143 = scmp.eq.s32.totalorder %s15, 1
      %p144 = por %p142, %p143
      %p145 = scmp.ne.s32.totalorder %s137, %s140
      %p146 = scmp.eq.s32.totalorder %s15, 0
      %p147 = por %p145, %p146
      %p148 = scmp.ne.s32.totalorder %s137, %s140
      %p149 = scmp.eq.s32.totalorder %s20, 1
      %p150 = por %p148, %p149
      %p151 = scmp.ne.s32.totalorder %s140, %s141
      %p152 = scmp.eq.s32.totalorder %s20, 0
      %p153 = por %p151, %p152
      %p154 = scmp.ne.s32.totalorder %s140, %s141
      %p155 = scmp.eq.s32.totalorder %s21, 1
      %p156 = por %p154, %p155
      %p158 = scmp.ne.s32.totalorder %s141, %s157
      %p159 = scmp.eq.s32.totalorder %s21, 0
      %p160 = por %p158, %p159
      %s161 = ssub.s32 %s22, %s34
      %s162 = ssub.s32 %s23, %s30
      %s163 = sor.u32 %s161, %s162
      %p164 = scmp.eq.s32.totalorder %s163, 0
      %s166 = sadd.s32 %s165, 1
      %s167 = scalar_select %p164, %s165, %s166
      %p170 = pneg %p164
      %p171 = scmp.eq.s32.totalorder %s15, 1
      %p172 = por %p170, %p171
      %p173 = scmp.ne.s32.totalorder %s165, %s168
      %p174 = scmp.eq.s32.totalorder %s15, 0
      %p175 = por %p173, %p174
      %p176 = scmp.ne.s32.totalorder %s165, %s168
      %p177 = scmp.eq.s32.totalorder %s20, 1
      %p178 = por %p176, %p177
      %p179 = scmp.ne.s32.totalorder %s168, %s169
      %p180 = scmp.eq.s32.totalorder %s20, 0
      %p181 = por %p179, %p180
      %p182 = scmp.ne.s32.totalorder %s168, %s169
      %p183 = scmp.eq.s32.totalorder %s21, 1
      %p184 = por %p182, %p183
      %p186 = scmp.ne.s32.totalorder %s169, %s185
      %p187 = scmp.eq.s32.totalorder %s21, 0
      %p188 = por %p186, %p187
      %p189 = scmp.le.s32.totalorder 1, %s15
      %p190 = scmp.lt.s32.totalorder %s15, 3
      %p191 = pnand %p189, %p190
      %p192 = pneg %p191
      // Predicated region
      $region9: #{tpu_custom_call.1} parent=5 // pred_check
        _
      $region10: #{tpu_custom_call.1} parent=5 // pred_check_branch
        %194 = sbr.rel (%p191) target = $region12
      $region11: #{tpu_custom_call.1} parent=5 // pred_region
        %s195 = ssub.s32 %s15, 1
        // Predicated region
        $region13: #{tpu_custom_call.1} parent=11 // pred_check
          %p196 = pneg %p76
        $region14: #{tpu_custom_call.1} parent=11 // pred_check_branch
          %198 = sbr.rel (%p196) target = $region16
        $region15: #{tpu_custom_call.1} parent=11 // pred_region
          _
        $region16: #{tpu_custom_call.1} parent=11 // pred_fallthru
          _
        // Predicated region
        $region17: #{tpu_custom_call.1} parent=11 // pred_check
          %p199 = pneg %p97
        $region18: #{tpu_custom_call.1} parent=11 // pred_check_branch
          %201 = sbr.rel (%p199) target = $region20
        $region19: #{tpu_custom_call.1} parent=11 // pred_region
          _
        $region20: #{tpu_custom_call.1} parent=11 // pred_fallthru
          _
      $region12: #{tpu_custom_call.1} parent=5 // pred_fallthru
        _
      %p202 = scmp.lt.s32.totalorder %s15, 2
      // Predicated region
      $region21: #{tpu_custom_call.1} parent=5 // pred_check
        %p203 = pneg %p202
      $region22: #{tpu_custom_call.1} parent=5 // pred_check_branch
        %205 = sbr.rel (%p203) target = $region24
      $region23: #{tpu_custom_call.1} parent=5 // pred_region
        // Predicated region
        $region25: #{tpu_custom_call.1} parent=23 // pred_check
          %p206 = pneg %p49
        $region26: #{tpu_custom_call.1} parent=23 // pred_check_branch
          %208 = sbr.rel (%p206) target = $region28
        $region27: #{tpu_custom_call.1} parent=23 // pred_region
          %s209 = smul.u32 128, %s23
          %p210 = scmp.lt.s32.totalorder %s22, 1
          %s211 = scalar_select %p210, %s22, 1
          %p212 = scmp.lt.s32.totalorder %s209, 127
          %s213 = scalar_select %p212, %s209, 127
          %s214 = smul.addr %s211, 128
          %s215 = sadd.s32 %s213, %s214
          %s216 = smul.addr %s215, 8
          %s217 = scalar_lea.vmem %s0, %s216
          %s218 = smul.u32 128, %s23
        $region28: #{tpu_custom_call.1} parent=23 // pred_fallthru
          _
      $region24: #{tpu_custom_call.1} parent=5 // pred_fallthru
        _
      %p219 = scmp.le.s32.totalorder 1, %s15
      %p220 = scmp.lt.s32.totalorder %s15, 3
      %p221 = pnand %p219, %p220
      %p222 = pneg %p221
      // Predicated region
      $region29: #{tpu_custom_call.1} parent=5 // pred_check
        _
      $region30: #{tpu_custom_call.1} parent=5 // pred_check_branch
        %224 = sbr.rel (%p221) target = $region32
      $region31: #{tpu_custom_call.1} parent=5 // pred_region
        %s225 = ssub.s32 %s15, 1
        %s226 = smul.u32 128, %s25
        %p227 = scmp.lt.s32.totalorder %s24, 1
        %s228 = scalar_select %p227, %s24, 1
        %p229 = scmp.lt.s32.totalorder %s226, 127
        %s230 = scalar_select %p229, %s226, 127
        %s231 = smul.addr %s228, 128
        %s232 = sadd.s32 %s230, %s231
        %s233 = smul.addr %s232, 8
        %s234 = scalar_lea.vmem %s0, %s233
        %p235 = pneg %p55
        %p236 = pneg %p52
        %p237 = pneg %p76
        %p238 = pneg %p73
        %p239 = pneg %p97
        %p240 = pneg %p94
        %p241 = pneg %p125
        %p242 = pneg %p122
        %s243 = smul.u32 128, %s25
        %p244 = scmp.lt.s32.totalorder %s24, 1
        %s245 = scalar_select %p244, %s24, 1
        %p246 = scmp.lt.s32.totalorder %s243, 127
        %s247 = scalar_select %p246, %s243, 127
        %s248 = smul.addr %s245, 128
        %s249 = sadd.s32 %s247, %s248
        %s250 = smul.addr %s249, 8
        %s251 = scalar_lea.vmem %s3, %s250
        %p252 = pneg %p153
        %p253 = pneg %p150
        %s254 = sand.u32 %s140, 1
        %s255 = scalar_lea.sflag [#allocation3], %s254
        %s256 = sand.u32 %s140, 1
        %s257 = smul.addr %s256, 32
        %s258 = scalar_lea.vmem [#allocation2], %s257
        %p259 = pneg %p181
        %p260 = pneg %p178
        %s261 = smul.u32 128, %s25
        %p262 = scmp.lt.s32.totalorder %s24, 1
        %s263 = scalar_select %p262, %s24, 1
        %p264 = scmp.lt.s32.totalorder %s261, 127
        %s265 = scalar_select %p264, %s261, 127
        %s266 = smul.addr %s263, 128
        %s267 = sadd.s32 %s265, %s266
        %s268 = smul.addr %s267, 8
        %s269 = scalar_lea.vmem %s5, %s268
        %s270 = smul.u32 128, %s25
        %p271 = scmp.lt.s32.totalorder %s24, 1
        %s272 = scalar_select %p271, %s24, 1
        %p273 = scmp.lt.s32.totalorder %s270, 127
        %s274 = scalar_select %p273, %s270, 127
        %s275 = smul.addr %s272, 128
        %s276 = sadd.s32 %s274, %s275
        %s277 = smul.addr %s276, 8
        %s278 = scalar_lea.vmem %s0, %s277
        %s279 = smul.u32 128, %s25
        %s280 = smul.u32 128, %s25
        %p281 = scmp.lt.s32.totalorder %s24, 1
        %s282 = scalar_select %p281, %s24, 1
        %p283 = scmp.lt.s32.totalorder %s280, 127
        %s284 = scalar_select %p283, %s280, 127
        %s285 = smul.addr %s282, 128
        %s286 = sadd.s32 %s284, %s285
        %s287 = smul.addr %s286, 8
        %s288 = scalar_lea.vmem %s3, %s287
        %s289 = smul.u32 128, %s25
        %s290 = smul.u32 8, %s25
        %s291 = smul.u32 128, %s25
        %p292 = scmp.lt.s32.totalorder %s24, 1
        %s293 = scalar_select %p292, %s24, 1
        %p294 = scmp.lt.s32.totalorder %s291, 127
        %s295 = scalar_select %p294, %s291, 127
        %s296 = smul.addr %s293, 128
        %s297 = sadd.s32 %s295, %s296
        %s298 = smul.addr %s297, 8
        %s299 = scalar_lea.vmem %s5, %s298
        %s300 = smul.u32 128, %s25
        %v301 = vld [vmem:[%s278] sm:$0xff]
        %v302 = vld [vmem:[%s278 + $0x8] sm:$0xff]
        %v303 = vld [vmem:[%s278 + $0x10] sm:$0xff]
        %v304 = vld [vmem:[%s278 + $0x18] sm:$0xff]
        %v305 = vld [vmem:[%s278 + $0x20] sm:$0xff]
        %v306 = vld [vmem:[%s278 + $0x28] sm:$0xff]
        %v307 = vld [vmem:[%s278 + $0x30] sm:$0xff]
        %v308 = vld [vmem:[%s278 + $0x38] sm:$0xff]
        %v309 = vld [vmem:[%s278 + $0x40] sm:$0xff]
        %v310 = vld [vmem:[%s278 + $0x48] sm:$0xff]
        %v311 = vld [vmem:[%s278 + $0x50] sm:$0xff]
        %v312 = vld [vmem:[%s278 + $0x58] sm:$0xff]
        %v313 = vld [vmem:[%s278 + $0x60] sm:$0xff]
        %v314 = vld [vmem:[%s278 + $0x68] sm:$0xff]
        %v315 = vld [vmem:[%s278 + $0x70] sm:$0xff]
        %v316 = vld [vmem:[%s278 + $0x78] sm:$0xff]
        %v317 = vld [vmem:[%s278 + $0x80] sm:$0xff]
        %v318 = vld [vmem:[%s278 + $0x88] sm:$0xff]
        %v319 = vld [vmem:[%s278 + $0x90] sm:$0xff]
        %v320 = vld [vmem:[%s278 + $0x98] sm:$0xff]
        %v321 = vld [vmem:[%s278 + $0xa0] sm:$0xff]
        %v322 = vld [vmem:[%s278 + $0xa8] sm:$0xff]
        %v323 = vld [vmem:[%s278 + $0xb0] sm:$0xff]
        %v324 = vld [vmem:[%s278 + $0xb8] sm:$0xff]
        %v325 = vld [vmem:[%s278 + $0xc0] sm:$0xff]
        %v326 = vld [vmem:[%s278 + $0xc8] sm:$0xff]
        %v327 = vld [vmem:[%s278 + $0xd0] sm:$0xff]
        %v328 = vld [vmem:[%s278 + $0xd8] sm:$0xff]
        %v329 = vld [vmem:[%s278 + $0xe0] sm:$0xff]
        %v330 = vld [vmem:[%s278 + $0xe8] sm:$0xff]
        %v331 = vld [vmem:[%s278 + $0xf0] sm:$0xff]
        %v332 = vld [vmem:[%s278 + $0xf8] sm:$0xff]
        %v333 = vld [vmem:[%s278 + $0x100] sm:$0xff]
        %v334 = vld [vmem:[%s278 + $0x108] sm:$0xff]
        %v335 = vld [vmem:[%s278 + $0x110] sm:$0xff]
        %v336 = vld [vmem:[%s278 + $0x118] sm:$0xff]
        %v337 = vld [vmem:[%s278 + $0x120] sm:$0xff]
        %v338 = vld [vmem:[%s278 + $0x128] sm:$0xff]
        %v339 = vld [vmem:[%s278 + $0x130] sm:$0xff]
        %v340 = vld [vmem:[%s278 + $0x138] sm:$0xff]
        %v341 = vld [vmem:[%s278 + $0x140] sm:$0xff]
        %v342 = vld [vmem:[%s278 + $0x148] sm:$0xff]
        %v343 = vld [vmem:[%s278 + $0x150] sm:$0xff]
        %v344 = vld [vmem:[%s278 + $0x158] sm:$0xff]
        %v345 = vld [vmem:[%s278 + $0x160] sm:$0xff]
        %v346 = vld [vmem:[%s278 + $0x168] sm:$0xff]
        %v347 = vld [vmem:[%s278 + $0x170] sm:$0xff]
        %v348 = vld [vmem:[%s278 + $0x178] sm:$0xff]
        %v349 = vld [vmem:[%s278 + $0x180] sm:$0xff]
        %v350 = vld [vmem:[%s278 + $0x188] sm:$0xff]
        %v351 = vld [vmem:[%s278 + $0x190] sm:$0xff]
        %v352 = vld [vmem:[%s278 + $0x198] sm:$0xff]
        %v353 = vld [vmem:[%s278 + $0x1a0] sm:$0xff]
        %v354 = vld [vmem:[%s278 + $0x1a8] sm:$0xff]
        %v355 = vld [vmem:[%s278 + $0x1b0] sm:$0xff]
        %v356 = vld [vmem:[%s278 + $0x1b8] sm:$0xff]
        %v357 = vld [vmem:[%s278 + $0x1c0] sm:$0xff]
        %v358 = vld [vmem:[%s278 + $0x1c8] sm:$0xff]
        %v359 = vld [vmem:[%s278 + $0x1d0] sm:$0xff]
        %v360 = vld [vmem:[%s278 + $0x1d8] sm:$0xff]
        %v361 = vld [vmem:[%s278 + $0x1e0] sm:$0xff]
        %v362 = vld [vmem:[%s278 + $0x1e8] sm:$0xff]
        %v363 = vld [vmem:[%s278 + $0x1f0] sm:$0xff]
        %v364 = vld [vmem:[%s278 + $0x1f8] sm:$0xff]
        %v365 = vld [vmem:[%s278 + $0x200] sm:$0xff]
        %v366 = vld [vmem:[%s278 + $0x208] sm:$0xff]
        %v367 = vld [vmem:[%s278 + $0x210] sm:$0xff]
        %v368 = vld [vmem:[%s278 + $0x218] sm:$0xff]
        %v369 = vld [vmem:[%s278 + $0x220] sm:$0xff]
        %v370 = vld [vmem:[%s278 + $0x228] sm:$0xff]
        %v371 = vld [vmem:[%s278 + $0x230] sm:$0xff]
        %v372 = vld [vmem:[%s278 + $0x238] sm:$0xff]
        %v373 = vld [vmem:[%s278 + $0x240] sm:$0xff]
        %v374 = vld [vmem:[%s278 + $0x248] sm:$0xff]
        %v375 = vld [vmem:[%s278 + $0x250] sm:$0xff]
        %v376 = vld [vmem:[%s278 + $0x258] sm:$0xff]
        %v377 = vld [vmem:[%s278 + $0x260] sm:$0xff]
        %v378 = vld [vmem:[%s278 + $0x268] sm:$0xff]
        %v379 = vld [vmem:[%s278 + $0x270] sm:$0xff]
        %v380 = vld [vmem:[%s278 + $0x278] sm:$0xff]
        %v381 = vld [vmem:[%s278 + $0x280] sm:$0xff]
        %v382 = vld [vmem:[%s278 + $0x288] sm:$0xff]
        %v383 = vld [vmem:[%s278 + $0x290] sm:$0xff]
        %v384 = vld [vmem:[%s278 + $0x298] sm:$0xff]
        %v385 = vld [vmem:[%s278 + $0x2a0] sm:$0xff]
        %v386 = vld [vmem:[%s278 + $0x2a8] sm:$0xff]
        %v387 = vld [vmem:[%s278 + $0x2b0] sm:$0xff]
        %v388 = vld [vmem:[%s278 + $0x2b8] sm:$0xff]
        %v389 = vld [vmem:[%s278 + $0x2c0] sm:$0xff]
        %v390 = vld [vmem:[%s278 + $0x2c8] sm:$0xff]
        %v391 = vld [vmem:[%s278 + $0x2d0] sm:$0xff]
        %v392 = vld [vmem:[%s278 + $0x2d8] sm:$0xff]
        %v393 = vld [vmem:[%s278 + $0x2e0] sm:$0xff]
        %v394 = vld [vmem:[%s278 + $0x2e8] sm:$0xff]
        %v395 = vld [vmem:[%s278 + $0x2f0] sm:$0xff]
        %v396 = vld [vmem:[%s278 + $0x2f8] sm:$0xff]
        %v397 = vld [vmem:[%s278 + $0x300] sm:$0xff]
        %v398 = vld [vmem:[%s278 + $0x308] sm:$0xff]
        %v399 = vld [vmem:[%s278 + $0x310] sm:$0xff]
        %v400 = vld [vmem:[%s278 + $0x318] sm:$0xff]
        %v401 = vld [vmem:[%s278 + $0x320] sm:$0xff]
        %v402 = vld [vmem:[%s278 + $0x328] sm:$0xff]
        %v403 = vld [vmem:[%s278 + $0x330] sm:$0xff]
        %v404 = vld [vmem:[%s278 + $0x338] sm:$0xff]
        %v405 = vld [vmem:[%s278 + $0x340] sm:$0xff]
        %v406 = vld [vmem:[%s278 + $0x348] sm:$0xff]
        %v407 = vld [vmem:[%s278 + $0x350] sm:$0xff]
        %v408 = vld [vmem:[%s278 + $0x358] sm:$0xff]
        %v409 = vld [vmem:[%s278 + $0x360] sm:$0xff]
        %v410 = vld [vmem:[%s278 + $0x368] sm:$0xff]
        %v411 = vld [vmem:[%s278 + $0x370] sm:$0xff]
        %v412 = vld [vmem:[%s278 + $0x378] sm:$0xff]
        %v413 = vld [vmem:[%s278 + $0x380] sm:$0xff]
        %v414 = vld [vmem:[%s278 + $0x388] sm:$0xff]
        %v415 = vld [vmem:[%s278 + $0x390] sm:$0xff]
        %v416 = vld [vmem:[%s278 + $0x398] sm:$0xff]
        %v417 = vld [vmem:[%s278 + $0x3a0] sm:$0xff]
        %v418 = vld [vmem:[%s278 + $0x3a8] sm:$0xff]
        %v419 = vld [vmem:[%s278 + $0x3b0] sm:$0xff]
        %v420 = vld [vmem:[%s278 + $0x3b8] sm:$0xff]
        %v421 = vld [vmem:[%s278 + $0x3c0] sm:$0xff]
        %v422 = vld [vmem:[%s278 + $0x3c8] sm:$0xff]
        %v423 = vld [vmem:[%s278 + $0x3d0] sm:$0xff]
        %v424 = vld [vmem:[%s278 + $0x3d8] sm:$0xff]
        %v425 = vld [vmem:[%s278 + $0x3e0] sm:$0xff]
        %v426 = vld [vmem:[%s278 + $0x3e8] sm:$0xff]
        %v427 = vld [vmem:[%s278 + $0x3f0] sm:$0xff]
        %v428 = vld [vmem:[%s278 + $0x3f8] sm:$0xff]
        %v429 = vld [vmem:[%s1] sm:$0xff]
        %v430 = vld [vmem:[%s1 + $0x8] sm:$0xff]
        %v431 = vld [vmem:[%s1 + $0x10] sm:$0xff]
        %v432 = vld [vmem:[%s1 + $0x18] sm:$0xff]
        %v433 = vld [vmem:[%s2] sm:$0x1]
        %v435 = vperm.slane %v433, 0
        %vm437 = vcmask 261120
        %v439 = vsel %vm437, %v301, 0
        %v442 = vsel %vm437, %v302, 0
        %v445 = vsel %vm437, %v303, 0
        %v448 = vsel %vm437, %v304, 0
        %v451 = vsel %vm437, %v305, 0
        %v454 = vsel %vm437, %v306, 0
        %v457 = vsel %vm437, %v307, 0
        %v460 = vsel %vm437, %v308, 0
        %v463 = vsel %vm437, %v309, 0
        %v466 = vsel %vm437, %v310, 0
        %v469 = vsel %vm437, %v311, 0
        %v472 = vsel %vm437, %v312, 0
        %v475 = vsel %vm437, %v313, 0
        %v478 = vsel %vm437, %v314, 0
        %v481 = vsel %vm437, %v315, 0
        %v484 = vsel %vm437, %v316, 0
        %v487 = vsel %vm437, %v317, 0
        %v490 = vsel %vm437, %v318, 0
        %v493 = vsel %vm437, %v319, 0
        %v496 = vsel %vm437, %v320, 0
        %v499 = vsel %vm437, %v321, 0
        %v502 = vsel %vm437, %v322, 0
        %v505 = vsel %vm437, %v323, 0
        %v508 = vsel %vm437, %v324, 0
        %v511 = vsel %vm437, %v325, 0
        %v514 = vsel %vm437, %v326, 0
        %v517 = vsel %vm437, %v327, 0
        %v520 = vsel %vm437, %v328, 0
        %v523 = vsel %vm437, %v329, 0
        %v526 = vsel %vm437, %v330, 0
        %v529 = vsel %vm437, %v331, 0
        %v532 = vsel %vm437, %v332, 0
        %v535 = vsel %vm437, %v333, 0
        %v538 = vsel %vm437, %v334, 0
        %v541 = vsel %vm437, %v335, 0
        %v544 = vsel %vm437, %v336, 0
        %v547 = vsel %vm437, %v337, 0
        %v550 = vsel %vm437, %v338, 0
        %v553 = vsel %vm437, %v339, 0
        %v556 = vsel %vm437, %v340, 0
        %v559 = vsel %vm437, %v341, 0
        %v562 = vsel %vm437, %v342, 0
        %v565 = vsel %vm437, %v343, 0
        %v568 = vsel %vm437, %v344, 0
        %v571 = vsel %vm437, %v345, 0
        %v574 = vsel %vm437, %v346, 0
        %v577 = vsel %vm437, %v347, 0
        %v580 = vsel %vm437, %v348, 0
        %v583 = vsel %vm437, %v349, 0
        %v586 = vsel %vm437, %v350, 0
        %v589 = vsel %vm437, %v351, 0
        %v592 = vsel %vm437, %v352, 0
        %v595 = vsel %vm437, %v353, 0
        %v598 = vsel %vm437, %v354, 0
        %v601 = vsel %vm437, %v355, 0
        %v604 = vsel %vm437, %v356, 0
        %v607 = vsel %vm437, %v357, 0
        %v610 = vsel %vm437, %v358, 0
        %v613 = vsel %vm437, %v359, 0
        %v616 = vsel %vm437, %v360, 0
        %v619 = vsel %vm437, %v361, 0
        %v622 = vsel %vm437, %v362, 0
        %v625 = vsel %vm437, %v363, 0
        %v628 = vsel %vm437, %v364, 0
        %v631 = vsel %vm437, %v365, 0
        %v634 = vsel %vm437, %v366, 0
        %v637 = vsel %vm437, %v367, 0
        %v640 = vsel %vm437, %v368, 0
        %v643 = vsel %vm437, %v369, 0
        %v646 = vsel %vm437, %v370, 0
        %v649 = vsel %vm437, %v371, 0
        %v652 = vsel %vm437, %v372, 0
        %v655 = vsel %vm437, %v373, 0
        %v658 = vsel %vm437, %v374, 0
        %v661 = vsel %vm437, %v375, 0
        %v664 = vsel %vm437, %v376, 0
        %v667 = vsel %vm437, %v377, 0
        %v670 = vsel %vm437, %v378, 0
        %v673 = vsel %vm437, %v379, 0
        %v676 = vsel %vm437, %v380, 0
        %v679 = vsel %vm437, %v381, 0
        %v682 = vsel %vm437, %v382, 0
        %v685 = vsel %vm437, %v383, 0
        %v688 = vsel %vm437, %v384, 0
        %v691 = vsel %vm437, %v385, 0
        %v694 = vsel %vm437, %v386, 0
        %v697 = vsel %vm437, %v387, 0
        %v700 = vsel %vm437, %v388, 0
        %v703 = vsel %vm437, %v389, 0
        %v706 = vsel %vm437, %v390, 0
        %v709 = vsel %vm437, %v391, 0
        %v712 = vsel %vm437, %v392, 0
        %v715 = vsel %vm437, %v393, 0
        %v718 = vsel %vm437, %v394, 0
        %v721 = vsel %vm437, %v395, 0
        %v724 = vsel %vm437, %v396, 0
        %v727 = vsel %vm437, %v397, 0
        %v730 = vsel %vm437, %v398, 0
        %v733 = vsel %vm437, %v399, 0
        %v736 = vsel %vm437, %v400, 0
        %v739 = vsel %vm437, %v401, 0
        %v742 = vsel %vm437, %v402, 0
        %v745 = vsel %vm437, %v403, 0
        %v748 = vsel %vm437, %v404, 0
        %v751 = vsel %vm437, %v405, 0
        %v754 = vsel %vm437, %v406, 0
        %v757 = vsel %vm437, %v407, 0
        %v760 = vsel %vm437, %v408, 0
        %v763 = vsel %vm437, %v409, 0
        %v766 = vsel %vm437, %v410, 0
        %v769 = vsel %vm437, %v411, 0
        %v772 = vsel %vm437, %v412, 0
        %v775 = vsel %vm437, %v413, 0
        %v778 = vsel %vm437, %v414, 0
        %v781 = vsel %vm437, %v415, 0
        %v784 = vsel %vm437, %v416, 0
        %v787 = vsel %vm437, %v417, 0
        %v790 = vsel %vm437, %v418, 0
        %v793 = vsel %vm437, %v419, 0
        %v796 = vsel %vm437, %v420, 0
        %v799 = vsel %vm437, %v421, 0
        %v802 = vsel %vm437, %v422, 0
        %v805 = vsel %vm437, %v423, 0
        %v808 = vsel %vm437, %v424, 0
        %v811 = vsel %vm437, %v425, 0
        %v814 = vsel %vm437, %v426, 0
        %v817 = vsel %vm437, %v427, 0
        %v820 = vsel %vm437, %v428, 0
        %822 = vmatpush.msra.mxu0 0.0
        %823 = vmatpush.msra.mxu0 0.0
        %824 = vmatpush.msra.mxu0 0.0
        %825 = vmatpush.msra.mxu0 0.0
        %826 = vmatpush.msra.mxu0 0.0
        %827 = vmatpush.msra.mxu0 0.0
        %828 = vmatpush.msra.mxu0 0.0
        %829 = vmatpush.msra.mxu0 0.0
        %830 = vmatpush.msra.mxu0 0.0
        %831 = vmatpush.msra.mxu0 0.0
        %832 = vmatpush.msra.mxu0 0.0
        %833 = vmatpush.msra.mxu0 0.0
        %834 = vmatpush.msra.mxu0 %v432
        %835 = vmatpush.msra.mxu0 %v431
        %836 = vmatpush.msra.mxu0 %v430
        %837 = vmatpush.msra.mxu0 %v429
        %838 = vmatmul.f32.gmra.mxu0 %v439
        %v839 = vpop.f32.mrf.mxu0
        %v840 = vadd.f32 %v435, %v839
        %841 = vmatmul.f32.gmra.mxu0 %v442
        %v842 = vpop.f32.mrf.mxu0
        %v843 = vadd.f32 %v435, %v842
        %844 = vmatmul.f32.gmra.mxu0 %v445
        %v845 = vpop.f32.mrf.mxu0
        %v846 = vadd.f32 %v435, %v845
        %847 = vmatmul.f32.gmra.mxu0 %v448
        %v848 = vpop.f32.mrf.mxu0
        %v849 = vadd.f32 %v435, %v848
        %850 = vmatmul.f32.gmra.mxu0 %v451
        %v851 = vpop.f32.mrf.mxu0
        %v852 = vadd.f32 %v435, %v851
        %853 = vmatmul.f32.gmra.mxu0 %v454
        %v854 = vpop.f32.mrf.mxu0
        %v855 = vadd.f32 %v435, %v854
        %856 = vmatmul.f32.gmra.mxu0 %v457
        %v857 = vpop.f32.mrf.mxu0
        %v858 = vadd.f32 %v435, %v857
        %859 = vmatmul.f32.gmra.mxu0 %v460
        %v860 = vpop.f32.mrf.mxu0
        %v861 = vadd.f32 %v435, %v860
        %862 = vmatmul.f32.gmra.mxu0 %v463
        %v863 = vpop.f32.mrf.mxu0
        %v864 = vadd.f32 %v435, %v863
        %865 = vmatmul.f32.gmra.mxu0 %v466
        %v866 = vpop.f32.mrf.mxu0
        %v867 = vadd.f32 %v435, %v866
        %868 = vmatmul.f32.gmra.mxu0 %v469
        %v869 = vpop.f32.mrf.mxu0
        %v870 = vadd.f32 %v435, %v869
        %871 = vmatmul.f32.gmra.mxu0 %v472
        %v872 = vpop.f32.mrf.mxu0
        %v873 = vadd.f32 %v435, %v872
        %874 = vmatmul.f32.gmra.mxu0 %v475
        %v875 = vpop.f32.mrf.mxu0
        %v876 = vadd.f32 %v435, %v875
        %877 = vmatmul.f32.gmra.mxu0 %v478
        %v878 = vpop.f32.mrf.mxu0
        %v879 = vadd.f32 %v435, %v878
        %880 = vmatmul.f32.gmra.mxu0 %v481
        %v881 = vpop.f32.mrf.mxu0
        %v882 = vadd.f32 %v435, %v881
        %883 = vmatmul.f32.gmra.mxu0 %v484
        %v884 = vpop.f32.mrf.mxu0
        %v885 = vadd.f32 %v435, %v884
        %886 = vmatmul.f32.gmra.mxu0 %v487
        %v887 = vpop.f32.mrf.mxu0
        %v888 = vadd.f32 %v435, %v887
        %889 = vmatmul.f32.gmra.mxu0 %v490
        %v890 = vpop.f32.mrf.mxu0
        %v891 = vadd.f32 %v435, %v890
        %892 = vmatmul.f32.gmra.mxu0 %v493
        %v893 = vpop.f32.mrf.mxu0
        %v894 = vadd.f32 %v435, %v893
        %895 = vmatmul.f32.gmra.mxu0 %v496
        %v896 = vpop.f32.mrf.mxu0
        %v897 = vadd.f32 %v435, %v896
        %898 = vmatmul.f32.gmra.mxu0 %v499
        %v899 = vpop.f32.mrf.mxu0
        %v900 = vadd.f32 %v435, %v899
        %901 = vmatmul.f32.gmra.mxu0 %v502
        %v902 = vpop.f32.mrf.mxu0
        %v903 = vadd.f32 %v435, %v902
        %904 = vmatmul.f32.gmra.mxu0 %v505
        %v905 = vpop.f32.mrf.mxu0
        %v906 = vadd.f32 %v435, %v905
        %907 = vmatmul.f32.gmra.mxu0 %v508
        %v908 = vpop.f32.mrf.mxu0
        %v909 = vadd.f32 %v435, %v908
        %910 = vmatmul.f32.gmra.mxu0 %v511
        %v911 = vpop.f32.mrf.mxu0
        %v912 = vadd.f32 %v435, %v911
        %913 = vmatmul.f32.gmra.mxu0 %v514
        %v914 = vpop.f32.mrf.mxu0
        %v915 = vadd.f32 %v435, %v914
        %916 = vmatmul.f32.gmra.mxu0 %v517
        %v917 = vpop.f32.mrf.mxu0
        %v918 = vadd.f32 %v435, %v917
        %919 = vmatmul.f32.gmra.mxu0 %v520
        %v920 = vpop.f32.mrf.mxu0
        %v921 = vadd.f32 %v435, %v920
        %922 = vmatmul.f32.gmra.mxu0 %v523
        %v923 = vpop.f32.mrf.mxu0
        %v924 = vadd.f32 %v435, %v923
        %925 = vmatmul.f32.gmra.mxu0 %v526
        %v926 = vpop.f32.mrf.mxu0
        %v927 = vadd.f32 %v435, %v926
        %928 = vmatmul.f32.gmra.mxu0 %v529
        %v929 = vpop.f32.mrf.mxu0
        %v930 = vadd.f32 %v435, %v929
        %931 = vmatmul.f32.gmra.mxu0 %v532
        %v932 = vpop.f32.mrf.mxu0
        %v933 = vadd.f32 %v435, %v932
        %934 = vmatmul.f32.gmra.mxu0 %v535
        %v935 = vpop.f32.mrf.mxu0
        %v936 = vadd.f32 %v435, %v935
        %937 = vmatmul.f32.gmra.mxu0 %v538
        %v938 = vpop.f32.mrf.mxu0
        %v939 = vadd.f32 %v435, %v938
        %940 = vmatmul.f32.gmra.mxu0 %v541
        %v941 = vpop.f32.mrf.mxu0
        %v942 = vadd.f32 %v435, %v941
        %943 = vmatmul.f32.gmra.mxu0 %v544
        %v944 = vpop.f32.mrf.mxu0
        %v945 = vadd.f32 %v435, %v944
        %946 = vmatmul.f32.gmra.mxu0 %v547
        %v947 = vpop.f32.mrf.mxu0
        %v948 = vadd.f32 %v435, %v947
        %949 = vmatmul.f32.gmra.mxu0 %v550
        %v950 = vpop.f32.mrf.mxu0
        %v951 = vadd.f32 %v435, %v950
        %952 = vmatmul.f32.gmra.mxu0 %v553
        %v953 = vpop.f32.mrf.mxu0
        %v954 = vadd.f32 %v435, %v953
        %955 = vmatmul.f32.gmra.mxu0 %v556
        %v956 = vpop.f32.mrf.mxu0
        %v957 = vadd.f32 %v435, %v956
        %958 = vmatmul.f32.gmra.mxu0 %v559
        %v959 = vpop.f32.mrf.mxu0
        %v960 = vadd.f32 %v435, %v959
        %961 = vmatmul.f32.gmra.mxu0 %v562
        %v962 = vpop.f32.mrf.mxu0
        %v963 = vadd.f32 %v435, %v962
        %964 = vmatmul.f32.gmra.mxu0 %v565
        %v965 = vpop.f32.mrf.mxu0
        %v966 = vadd.f32 %v435, %v965
        %967 = vmatmul.f32.gmra.mxu0 %v568
        %v968 = vpop.f32.mrf.mxu0
        %v969 = vadd.f32 %v435, %v968
        %970 = vmatmul.f32.gmra.mxu0 %v571
        %v971 = vpop.f32.mrf.mxu0
        %v972 = vadd.f32 %v435, %v971
        %973 = vmatmul.f32.gmra.mxu0 %v574
        %v974 = vpop.f32.mrf.mxu0
        %v975 = vadd.f32 %v435, %v974
        %976 = vmatmul.f32.gmra.mxu0 %v577
        %v977 = vpop.f32.mrf.mxu0
        %v978 = vadd.f32 %v435, %v977
        %979 = vmatmul.f32.gmra.mxu0 %v580
        %v980 = vpop.f32.mrf.mxu0
        %v981 = vadd.f32 %v435, %v980
        %982 = vmatmul.f32.gmra.mxu0 %v583
        %v983 = vpop.f32.mrf.mxu0
        %v984 = vadd.f32 %v435, %v983
        %985 = vmatmul.f32.gmra.mxu0 %v586
        %v986 = vpop.f32.mrf.mxu0
        %v987 = vadd.f32 %v435, %v986
        %988 = vmatmul.f32.gmra.mxu0 %v589
        %v989 = vpop.f32.mrf.mxu0
        %v990 = vadd.f32 %v435, %v989
        %991 = vmatmul.f32.gmra.mxu0 %v592
        %v992 = vpop.f32.mrf.mxu0
        %v993 = vadd.f32 %v435, %v992
        %994 = vmatmul.f32.gmra.mxu0 %v595
        %v995 = vpop.f32.mrf.mxu0
        %v996 = vadd.f32 %v435, %v995
        %997 = vmatmul.f32.gmra.mxu0 %v598
        %v998 = vpop.f32.mrf.mxu0
        %v999 = vadd.f32 %v435, %v998
        %1000 = vmatmul.f32.gmra.mxu0 %v601
        %v1001 = vpop.f32.mrf.mxu0
        %v1002 = vadd.f32 %v435, %v1001
        %1003 = vmatmul.f32.gmra.mxu0 %v604
        %v1004 = vpop.f32.mrf.mxu0
        %v1005 = vadd.f32 %v435, %v1004
        %1006 = vmatmul.f32.gmra.mxu0 %v607
        %v1007 = vpop.f32.mrf.mxu0
        %v1008 = vadd.f32 %v435, %v1007
        %1009 = vmatmul.f32.gmra.mxu0 %v610
        %v1010 = vpop.f32.mrf.mxu0
        %v1011 = vadd.f32 %v435, %v1010
        %1012 = vmatmul.f32.gmra.mxu0 %v613
        %v1013 = vpop.f32.mrf.mxu0
        %v1014 = vadd.f32 %v435, %v1013
        %1015 = vmatmul.f32.gmra.mxu0 %v616
        %v1016 = vpop.f32.mrf.mxu0
        %v1017 = vadd.f32 %v435, %v1016
        %1018 = vmatmul.f32.gmra.mxu0 %v619
        %v1019 = vpop.f32.mrf.mxu0
        %v1020 = vadd.f32 %v435, %v1019
        %1021 = vmatmul.f32.gmra.mxu0 %v622
        %v1022 = vpop.f32.mrf.mxu0
        %v1023 = vadd.f32 %v435, %v1022
        %1024 = vmatmul.f32.gmra.mxu0 %v625
        %v1025 = vpop.f32.mrf.mxu0
        %v1026 = vadd.f32 %v435, %v1025
        %1027 = vmatmul.f32.gmra.mxu0 %v628
        %v1028 = vpop.f32.mrf.mxu0
        %v1029 = vadd.f32 %v435, %v1028
        %1030 = vmatmul.f32.gmra.mxu0 %v631
        %v1031 = vpop.f32.mrf.mxu0
        %v1032 = vadd.f32 %v435, %v1031
        %1033 = vmatmul.f32.gmra.mxu0 %v634
        %v1034 = vpop.f32.mrf.mxu0
        %v1035 = vadd.f32 %v435, %v1034
        %1036 = vmatmul.f32.gmra.mxu0 %v637
        %v1037 = vpop.f32.mrf.mxu0
        %v1038 = vadd.f32 %v435, %v1037
        %1039 = vmatmul.f32.gmra.mxu0 %v640
        %v1040 = vpop.f32.mrf.mxu0
        %v1041 = vadd.f32 %v435, %v1040
        %1042 = vmatmul.f32.gmra.mxu0 %v643
        %v1043 = vpop.f32.mrf.mxu0
        %v1044 = vadd.f32 %v435, %v1043
        %1045 = vmatmul.f32.gmra.mxu0 %v646
        %v1046 = vpop.f32.mrf.mxu0
        %v1047 = vadd.f32 %v435, %v1046
        %1048 = vmatmul.f32.gmra.mxu0 %v649
        %v1049 = vpop.f32.mrf.mxu0
        %v1050 = vadd.f32 %v435, %v1049
        %1051 = vmatmul.f32.gmra.mxu0 %v652
        %v1052 = vpop.f32.mrf.mxu0
        %v1053 = vadd.f32 %v435, %v1052
        %1054 = vmatmul.f32.gmra.mxu0 %v655
        %v1055 = vpop.f32.mrf.mxu0
        %v1056 = vadd.f32 %v435, %v1055
        %1057 = vmatmul.f32.gmra.mxu0 %v658
        %v1058 = vpop.f32.mrf.mxu0
        %v1059 = vadd.f32 %v435, %v1058
        %1060 = vmatmul.f32.gmra.mxu0 %v661
        %v1061 = vpop.f32.mrf.mxu0
        %v1062 = vadd.f32 %v435, %v1061
        %1063 = vmatmul.f32.gmra.mxu0 %v664
        %v1064 = vpop.f32.mrf.mxu0
        %v1065 = vadd.f32 %v435, %v1064
        %1066 = vmatmul.f32.gmra.mxu0 %v667
        %v1067 = vpop.f32.mrf.mxu0
        %v1068 = vadd.f32 %v435, %v1067
        %1069 = vmatmul.f32.gmra.mxu0 %v670
        %v1070 = vpop.f32.mrf.mxu0
        %v1071 = vadd.f32 %v435, %v1070
        %1072 = vmatmul.f32.gmra.mxu0 %v673
        %v1073 = vpop.f32.mrf.mxu0
        %v1074 = vadd.f32 %v435, %v1073
        %1075 = vmatmul.f32.gmra.mxu0 %v676
        %v1076 = vpop.f32.mrf.mxu0
        %v1077 = vadd.f32 %v435, %v1076
        %1078 = vmatmul.f32.gmra.mxu0 %v679
        %v1079 = vpop.f32.mrf.mxu0
        %v1080 = vadd.f32 %v435, %v1079
        %1081 = vmatmul.f32.gmra.mxu0 %v682
        %v1082 = vpop.f32.mrf.mxu0
        %v1083 = vadd.f32 %v435, %v1082
        %1084 = vmatmul.f32.gmra.mxu0 %v685
        %v1085 = vpop.f32.mrf.mxu0
        %v1086 = vadd.f32 %v435, %v1085
        %1087 = vmatmul.f32.gmra.mxu0 %v688
        %v1088 = vpop.f32.mrf.mxu0
        %v1089 = vadd.f32 %v435, %v1088
        %1090 = vmatmul.f32.gmra.mxu0 %v691
        %v1091 = vpop.f32.mrf.mxu0
        %v1092 = vadd.f32 %v435, %v1091
        %1093 = vmatmul.f32.gmra.mxu0 %v694
        %v1094 = vpop.f32.mrf.mxu0
        %v1095 = vadd.f32 %v435, %v1094
        %1096 = vmatmul.f32.gmra.mxu0 %v697
        %v1097 = vpop.f32.mrf.mxu0
        %v1098 = vadd.f32 %v435, %v1097
        %1099 = vmatmul.f32.gmra.mxu0 %v700
        %v1100 = vpop.f32.mrf.mxu0
        %v1101 = vadd.f32 %v435, %v1100
        %1102 = vmatmul.f32.gmra.mxu0 %v703
        %v1103 = vpop.f32.mrf.mxu0
        %v1104 = vadd.f32 %v435, %v1103
        %1105 = vmatmul.f32.gmra.mxu0 %v706
        %v1106 = vpop.f32.mrf.mxu0
        %v1107 = vadd.f32 %v435, %v1106
        %1108 = vmatmul.f32.gmra.mxu0 %v709
        %v1109 = vpop.f32.mrf.mxu0
        %v1110 = vadd.f32 %v435, %v1109
        %1111 = vmatmul.f32.gmra.mxu0 %v712
        %v1112 = vpop.f32.mrf.mxu0
        %v1113 = vadd.f32 %v435, %v1112
        %1114 = vmatmul.f32.gmra.mxu0 %v715
        %v1115 = vpop.f32.mrf.mxu0
        %v1116 = vadd.f32 %v435, %v1115
        %1117 = vmatmul.f32.gmra.mxu0 %v718
        %v1118 = vpop.f32.mrf.mxu0
        %v1119 = vadd.f32 %v435, %v1118
        %1120 = vmatmul.f32.gmra.mxu0 %v721
        %v1121 = vpop.f32.mrf.mxu0
        %v1122 = vadd.f32 %v435, %v1121
        %1123 = vmatmul.f32.gmra.mxu0 %v724
        %v1124 = vpop.f32.mrf.mxu0
        %v1125 = vadd.f32 %v435, %v1124
        %1126 = vmatmul.f32.gmra.mxu0 %v727
        %v1127 = vpop.f32.mrf.mxu0
        %v1128 = vadd.f32 %v435, %v1127
        %1129 = vmatmul.f32.gmra.mxu0 %v730
        %v1130 = vpop.f32.mrf.mxu0
        %v1131 = vadd.f32 %v435, %v1130
        %1132 = vmatmul.f32.gmra.mxu0 %v733
        %v1133 = vpop.f32.mrf.mxu0
        %v1134 = vadd.f32 %v435, %v1133
        %1135 = vmatmul.f32.gmra.mxu0 %v736
        %v1136 = vpop.f32.mrf.mxu0
        %v1137 = vadd.f32 %v435, %v1136
        %1138 = vmatmul.f32.gmra.mxu0 %v739
        %v1139 = vpop.f32.mrf.mxu0
        %v1140 = vadd.f32 %v435, %v1139
        %1141 = vmatmul.f32.gmra.mxu0 %v742
        %v1142 = vpop.f32.mrf.mxu0
        %v1143 = vadd.f32 %v435, %v1142
        %1144 = vmatmul.f32.gmra.mxu0 %v745
        %v1145 = vpop.f32.mrf.mxu0
        %v1146 = vadd.f32 %v435, %v1145
        %1147 = vmatmul.f32.gmra.mxu0 %v748
        %v1148 = vpop.f32.mrf.mxu0
        %v1149 = vadd.f32 %v435, %v1148
        %1150 = vmatmul.f32.gmra.mxu0 %v751
        %v1151 = vpop.f32.mrf.mxu0
        %v1152 = vadd.f32 %v435, %v1151
        %1153 = vmatmul.f32.gmra.mxu0 %v754
        %v1154 = vpop.f32.mrf.mxu0
        %v1155 = vadd.f32 %v435, %v1154
        %1156 = vmatmul.f32.gmra.mxu0 %v757
        %v1157 = vpop.f32.mrf.mxu0
        %v1158 = vadd.f32 %v435, %v1157
        %1159 = vmatmul.f32.gmra.mxu0 %v760
        %v1160 = vpop.f32.mrf.mxu0
        %v1161 = vadd.f32 %v435, %v1160
        %1162 = vmatmul.f32.gmra.mxu0 %v763
        %v1163 = vpop.f32.mrf.mxu0
        %v1164 = vadd.f32 %v435, %v1163
        %1165 = vmatmul.f32.gmra.mxu0 %v766
        %v1166 = vpop.f32.mrf.mxu0
        %v1167 = vadd.f32 %v435, %v1166
        %1168 = vmatmul.f32.gmra.mxu0 %v769
        %v1169 = vpop.f32.mrf.mxu0
        %v1170 = vadd.f32 %v435, %v1169
        %1171 = vmatmul.f32.gmra.mxu0 %v772
        %v1172 = vpop.f32.mrf.mxu0
        %v1173 = vadd.f32 %v435, %v1172
        %1174 = vmatmul.f32.gmra.mxu0 %v775
        %v1175 = vpop.f32.mrf.mxu0
        %v1176 = vadd.f32 %v435, %v1175
        %1177 = vmatmul.f32.gmra.mxu0 %v778
        %v1178 = vpop.f32.mrf.mxu0
        %v1179 = vadd.f32 %v435, %v1178
        %1180 = vmatmul.f32.gmra.mxu0 %v781
        %v1181 = vpop.f32.mrf.mxu0
        %v1182 = vadd.f32 %v435, %v1181
        %1183 = vmatmul.f32.gmra.mxu0 %v784
        %v1184 = vpop.f32.mrf.mxu0
        %v1185 = vadd.f32 %v435, %v1184
        %1186 = vmatmul.f32.gmra.mxu0 %v787
        %v1187 = vpop.f32.mrf.mxu0
        %v1188 = vadd.f32 %v435, %v1187
        %1189 = vmatmul.f32.gmra.mxu0 %v790
        %v1190 = vpop.f32.mrf.mxu0
        %v1191 = vadd.f32 %v435, %v1190
        %1192 = vmatmul.f32.gmra.mxu0 %v793
        %v1193 = vpop.f32.mrf.mxu0
        %v1194 = vadd.f32 %v435, %v1193
        %1195 = vmatmul.f32.gmra.mxu0 %v796
        %v1196 = vpop.f32.mrf.mxu0
        %v1197 = vadd.f32 %v435, %v1196
        %1198 = vmatmul.f32.gmra.mxu0 %v799
        %v1199 = vpop.f32.mrf.mxu0
        %v1200 = vadd.f32 %v435, %v1199
        %1201 = vmatmul.f32.gmra.mxu0 %v802
        %v1202 = vpop.f32.mrf.mxu0
        %v1203 = vadd.f32 %v435, %v1202
        %1204 = vmatmul.f32.gmra.mxu0 %v805
        %v1205 = vpop.f32.mrf.mxu0
        %v1206 = vadd.f32 %v435, %v1205
        %1207 = vmatmul.f32.gmra.mxu0 %v808
        %v1208 = vpop.f32.mrf.mxu0
        %v1209 = vadd.f32 %v435, %v1208
        %1210 = vmatmul.f32.gmra.mxu0 %v811
        %v1211 = vpop.f32.mrf.mxu0
        %v1212 = vadd.f32 %v435, %v1211
        %1213 = vmatmul.f32.gmra.mxu0 %v814
        %v1214 = vpop.f32.mrf.mxu0
        %v1215 = vadd.f32 %v435, %v1214
        %1216 = vmatmul.f32.gmra.mxu0 %v817
        %v1217 = vpop.f32.mrf.mxu0
        %v1218 = vadd.f32 %v435, %v1217
        %1219 = vmatmul.f32.gmra.mxu0 %v820
        %v1220 = vpop.f32.mrf.mxu0
        %v1221 = vadd.f32 %v435, %v1220
        %1222 = vdwg.mxu0
        %vm1223 = vcmask 31744
        %1224 = vst.msk [vmem:[%s288] sm:$0xff] %vm1223, %v840
        %1225 = vst.msk [vmem:[%s288 + $0x8] sm:$0xff] %vm1223, %v843
        %1226 = vst.msk [vmem:[%s288 + $0x10] sm:$0xff] %vm1223, %v846
        %1227 = vst.msk [vmem:[%s288 + $0x18] sm:$0xff] %vm1223, %v849
        %1228 = vst.msk [vmem:[%s288 + $0x20] sm:$0xff] %vm1223, %v852
        %1229 = vst.msk [vmem:[%s288 + $0x28] sm:$0xff] %vm1223, %v855
        %1230 = vst.msk [vmem:[%s288 + $0x30] sm:$0xff] %vm1223, %v858
        %1231 = vst.msk [vmem:[%s288 + $0x38] sm:$0xff] %vm1223, %v861
        %1232 = vst.msk [vmem:[%s288 + $0x40] sm:$0xff] %vm1223, %v864
        %1233 = vst.msk [vmem:[%s288 + $0x48] sm:$0xff] %vm1223, %v867
        %1234 = vst.msk [vmem:[%s288 + $0x50] sm:$0xff] %vm1223, %v870
        %1235 = vst.msk [vmem:[%s288 + $0x58] sm:$0xff] %vm1223, %v873
        %1236 = vst.msk [vmem:[%s288 + $0x60] sm:$0xff] %vm1223, %v876
        %1237 = vst.msk [vmem:[%s288 + $0x68] sm:$0xff] %vm1223, %v879
        %1238 = vst.msk [vmem:[%s288 + $0x70] sm:$0xff] %vm1223, %v882
        %1239 = vst.msk [vmem:[%s288 + $0x78] sm:$0xff] %vm1223, %v885
        %1240 = vst.msk [vmem:[%s288 + $0x80] sm:$0xff] %vm1223, %v888
        %1241 = vst.msk [vmem:[%s288 + $0x88] sm:$0xff] %vm1223, %v891
        %1242 = vst.msk [vmem:[%s288 + $0x90] sm:$0xff] %vm1223, %v894
        %1243 = vst.msk [vmem:[%s288 + $0x98] sm:$0xff] %vm1223, %v897
        %1244 = vst.msk [vmem:[%s288 + $0xa0] sm:$0xff] %vm1223, %v900
        %1245 = vst.msk [vmem:[%s288 + $0xa8] sm:$0xff] %vm1223, %v903
        %1246 = vst.msk [vmem:[%s288 + $0xb0] sm:$0xff] %vm1223, %v906
        %1247 = vst.msk [vmem:[%s288 + $0xb8] sm:$0xff] %vm1223, %v909
        %1248 = vst.msk [vmem:[%s288 + $0xc0] sm:$0xff] %vm1223, %v912
        %1249 = vst.msk [vmem:[%s288 + $0xc8] sm:$0xff] %vm1223, %v915
        %1250 = vst.msk [vmem:[%s288 + $0xd0] sm:$0xff] %vm1223, %v918
        %1251 = vst.msk [vmem:[%s288 + $0xd8] sm:$0xff] %vm1223, %v921
        %1252 = vst.msk [vmem:[%s288 + $0xe0] sm:$0xff] %vm1223, %v924
        %1253 = vst.msk [vmem:[%s288 + $0xe8] sm:$0xff] %vm1223, %v927
        %1254 = vst.msk [vmem:[%s288 + $0xf0] sm:$0xff] %vm1223, %v930
        %1255 = vst.msk [vmem:[%s288 + $0xf8] sm:$0xff] %vm1223, %v933
        %1256 = vst.msk [vmem:[%s288 + $0x100] sm:$0xff] %vm1223, %v936
        %1257 = vst.msk [vmem:[%s288 + $0x108] sm:$0xff] %vm1223, %v939
        %1258 = vst.msk [vmem:[%s288 + $0x110] sm:$0xff] %vm1223, %v942
        %1259 = vst.msk [vmem:[%s288 + $0x118] sm:$0xff] %vm1223, %v945
        %1260 = vst.msk [vmem:[%s288 + $0x120] sm:$0xff] %vm1223, %v948
        %1261 = vst.msk [vmem:[%s288 + $0x128] sm:$0xff] %vm1223, %v951
        %1262 = vst.msk [vmem:[%s288 + $0x130] sm:$0xff] %vm1223, %v954
        %1263 = vst.msk [vmem:[%s288 + $0x138] sm:$0xff] %vm1223, %v957
        %1264 = vst.msk [vmem:[%s288 + $0x140] sm:$0xff] %vm1223, %v960
        %1265 = vst.msk [vmem:[%s288 + $0x148] sm:$0xff] %vm1223, %v963
        %1266 = vst.msk [vmem:[%s288 + $0x150] sm:$0xff] %vm1223, %v966
        %1267 = vst.msk [vmem:[%s288 + $0x158] sm:$0xff] %vm1223, %v969
        %1268 = vst.msk [vmem:[%s288 + $0x160] sm:$0xff] %vm1223, %v972
        %1269 = vst.msk [vmem:[%s288 + $0x168] sm:$0xff] %vm1223, %v975
        %1270 = vst.msk [vmem:[%s288 + $0x170] sm:$0xff] %vm1223, %v978
        %1271 = vst.msk [vmem:[%s288 + $0x178] sm:$0xff] %vm1223, %v981
        %1272 = vst.msk [vmem:[%s288 + $0x180] sm:$0xff] %vm1223, %v984
        %1273 = vst.msk [vmem:[%s288 + $0x188] sm:$0xff] %vm1223, %v987
        %1274 = vst.msk [vmem:[%s288 + $0x190] sm:$0xff] %vm1223, %v990
        %1275 = vst.msk [vmem:[%s288 + $0x198] sm:$0xff] %vm1223, %v993
        %1276 = vst.msk [vmem:[%s288 + $0x1a0] sm:$0xff] %vm1223, %v996
        %1277 = vst.msk [vmem:[%s288 + $0x1a8] sm:$0xff] %vm1223, %v999
        %1278 = vst.msk [vmem:[%s288 + $0x1b0] sm:$0xff] %vm1223, %v1002
        %1279 = vst.msk [vmem:[%s288 + $0x1b8] sm:$0xff] %vm1223, %v1005
        %1280 = vst.msk [vmem:[%s288 + $0x1c0] sm:$0xff] %vm1223, %v1008
        %1281 = vst.msk [vmem:[%s288 + $0x1c8] sm:$0xff] %vm1223, %v1011
        %1282 = vst.msk [vmem:[%s288 + $0x1d0] sm:$0xff] %vm1223, %v1014
        %1283 = vst.msk [vmem:[%s288 + $0x1d8] sm:$0xff] %vm1223, %v1017
        %1284 = vst.msk [vmem:[%s288 + $0x1e0] sm:$0xff] %vm1223, %v1020
        %1285 = vst.msk [vmem:[%s288 + $0x1e8] sm:$0xff] %vm1223, %v1023
        %1286 = vst.msk [vmem:[%s288 + $0x1f0] sm:$0xff] %vm1223, %v1026
        %1287 = vst.msk [vmem:[%s288 + $0x1f8] sm:$0xff] %vm1223, %v1029
        %1288 = vst.msk [vmem:[%s288 + $0x200] sm:$0xff] %vm1223, %v1032
        %1289 = vst.msk [vmem:[%s288 + $0x208] sm:$0xff] %vm1223, %v1035
        %1290 = vst.msk [vmem:[%s288 + $0x210] sm:$0xff] %vm1223, %v1038
        %1291 = vst.msk [vmem:[%s288 + $0x218] sm:$0xff] %vm1223, %v1041
        %1292 = vst.msk [vmem:[%s288 + $0x220] sm:$0xff] %vm1223, %v1044
        %1293 = vst.msk [vmem:[%s288 + $0x228] sm:$0xff] %vm1223, %v1047
        %1294 = vst.msk [vmem:[%s288 + $0x230] sm:$0xff] %vm1223, %v1050
        %1295 = vst.msk [vmem:[%s288 + $0x238] sm:$0xff] %vm1223, %v1053
        %1296 = vst.msk [vmem:[%s288 + $0x240] sm:$0xff] %vm1223, %v1056
        %1297 = vst.msk [vmem:[%s288 + $0x248] sm:$0xff] %vm1223, %v1059
        %1298 = vst.msk [vmem:[%s288 + $0x250] sm:$0xff] %vm1223, %v1062
        %1299 = vst.msk [vmem:[%s288 + $0x258] sm:$0xff] %vm1223, %v1065
        %1300 = vst.msk [vmem:[%s288 + $0x260] sm:$0xff] %vm1223, %v1068
        %1301 = vst.msk [vmem:[%s288 + $0x268] sm:$0xff] %vm1223, %v1071
        %1302 = vst.msk [vmem:[%s288 + $0x270] sm:$0xff] %vm1223, %v1074
        %1303 = vst.msk [vmem:[%s288 + $0x278] sm:$0xff] %vm1223, %v1077
        %1304 = vst.msk [vmem:[%s288 + $0x280] sm:$0xff] %vm1223, %v1080
        %1305 = vst.msk [vmem:[%s288 + $0x288] sm:$0xff] %vm1223, %v1083
        %1306 = vst.msk [vmem:[%s288 + $0x290] sm:$0xff] %vm1223, %v1086
        %1307 = vst.msk [vmem:[%s288 + $0x298] sm:$0xff] %vm1223, %v1089
        %1308 = vst.msk [vmem:[%s288 + $0x2a0] sm:$0xff] %vm1223, %v1092
        %1309 = vst.msk [vmem:[%s288 + $0x2a8] sm:$0xff] %vm1223, %v1095
        %1310 = vst.msk [vmem:[%s288 + $0x2b0] sm:$0xff] %vm1223, %v1098
        %1311 = vst.msk [vmem:[%s288 + $0x2b8] sm:$0xff] %vm1223, %v1101
        %1312 = vst.msk [vmem:[%s288 + $0x2c0] sm:$0xff] %vm1223, %v1104
        %1313 = vst.msk [vmem:[%s288 + $0x2c8] sm:$0xff] %vm1223, %v1107
        %1314 = vst.msk [vmem:[%s288 + $0x2d0] sm:$0xff] %vm1223, %v1110
        %1315 = vst.msk [vmem:[%s288 + $0x2d8] sm:$0xff] %vm1223, %v1113
        %1316 = vst.msk [vmem:[%s288 + $0x2e0] sm:$0xff] %vm1223, %v1116
        %1317 = vst.msk [vmem:[%s288 + $0x2e8] sm:$0xff] %vm1223, %v1119
        %1318 = vst.msk [vmem:[%s288 + $0x2f0] sm:$0xff] %vm1223, %v1122
        %1319 = vst.msk [vmem:[%s288 + $0x2f8] sm:$0xff] %vm1223, %v1125
        %1320 = vst.msk [vmem:[%s288 + $0x300] sm:$0xff] %vm1223, %v1128
        %1321 = vst.msk [vmem:[%s288 + $0x308] sm:$0xff] %vm1223, %v1131
        %1322 = vst.msk [vmem:[%s288 + $0x310] sm:$0xff] %vm1223, %v1134
        %1323 = vst.msk [vmem:[%s288 + $0x318] sm:$0xff] %vm1223, %v1137
        %1324 = vst.msk [vmem:[%s288 + $0x320] sm:$0xff] %vm1223, %v1140
        %1325 = vst.msk [vmem:[%s288 + $0x328] sm:$0xff] %vm1223, %v1143
        %1326 = vst.msk [vmem:[%s288 + $0x330] sm:$0xff] %vm1223, %v1146
        %1327 = vst.msk [vmem:[%s288 + $0x338] sm:$0xff] %vm1223, %v1149
        %1328 = vst.msk [vmem:[%s288 + $0x340] sm:$0xff] %vm1223, %v1152
        %1329 = vst.msk [vmem:[%s288 + $0x348] sm:$0xff] %vm1223, %v1155
        %1330 = vst.msk [vmem:[%s288 + $0x350] sm:$0xff] %vm1223, %v1158
        %1331 = vst.msk [vmem:[%s288 + $0x358] sm:$0xff] %vm1223, %v1161
        %1332 = vst.msk [vmem:[%s288 + $0x360] sm:$0xff] %vm1223, %v1164
        %1333 = vst.msk [vmem:[%s288 + $0x368] sm:$0xff] %vm1223, %v1167
        %1334 = vst.msk [vmem:[%s288 + $0x370] sm:$0xff] %vm1223, %v1170
        %1335 = vst.msk [vmem:[%s288 + $0x378] sm:$0xff] %vm1223, %v1173
        %1336 = vst.msk [vmem:[%s288 + $0x380] sm:$0xff] %vm1223, %v1176
        %1337 = vst.msk [vmem:[%s288 + $0x388] sm:$0xff] %vm1223, %v1179
        %1338 = vst.msk [vmem:[%s288 + $0x390] sm:$0xff] %vm1223, %v1182
        %1339 = vst.msk [vmem:[%s288 + $0x398] sm:$0xff] %vm1223, %v1185
        %1340 = vst.msk [vmem:[%s288 + $0x3a0] sm:$0xff] %vm1223, %v1188
        %1341 = vst.msk [vmem:[%s288 + $0x3a8] sm:$0xff] %vm1223, %v1191
        %1342 = vst.msk [vmem:[%s288 + $0x3b0] sm:$0xff] %vm1223, %v1194
        %1343 = vst.msk [vmem:[%s288 + $0x3b8] sm:$0xff] %vm1223, %v1197
        %1344 = vst.msk [vmem:[%s288 + $0x3c0] sm:$0xff] %vm1223, %v1200
        %1345 = vst.msk [vmem:[%s288 + $0x3c8] sm:$0xff] %vm1223, %v1203
        %1346 = vst.msk [vmem:[%s288 + $0x3d0] sm:$0xff] %vm1223, %v1206
        %1347 = vst.msk [vmem:[%s288 + $0x3d8] sm:$0xff] %vm1223, %v1209
        %1348 = vst.msk [vmem:[%s288 + $0x3e0] sm:$0xff] %vm1223, %v1212
        %1349 = vst.msk [vmem:[%s288 + $0x3e8] sm:$0xff] %vm1223, %v1215
        %1350 = vst.msk [vmem:[%s288 + $0x3f0] sm:$0xff] %vm1223, %v1218
        %1351 = vst.msk [vmem:[%s288 + $0x3f8] sm:$0xff] %vm1223, %v1221
        %1480 = vrot.lane.b32.xlu0 %v840, 124
        %v1481 = vpop.permute.xlu0 %1480
        %1482 = vrot.lane.b32.xlu0 %v843, 124
        %v1483 = vpop.permute.xlu0 %1482
        %1484 = vrot.lane.b32.xlu0 %v846, 124
        %v1485 = vpop.permute.xlu0 %1484
        %1486 = vrot.lane.b32.xlu0 %v849, 124
        %v1487 = vpop.permute.xlu0 %1486
        %1488 = vrot.lane.b32.xlu0 %v852, 124
        %v1489 = vpop.permute.xlu0 %1488
        %1490 = vrot.lane.b32.xlu0 %v855, 124
        %v1491 = vpop.permute.xlu0 %1490
        %1492 = vrot.lane.b32.xlu0 %v858, 124
        %v1493 = vpop.permute.xlu0 %1492
        %1494 = vrot.lane.b32.xlu0 %v861, 124
        %v1495 = vpop.permute.xlu0 %1494
        %1496 = vrot.lane.b32.xlu0 %v864, 124
        %v1497 = vpop.permute.xlu0 %1496
        %1498 = vrot.lane.b32.xlu0 %v867, 124
        %v1499 = vpop.permute.xlu0 %1498
        %1500 = vrot.lane.b32.xlu0 %v870, 124
        %v1501 = vpop.permute.xlu0 %1500
        %1502 = vrot.lane.b32.xlu0 %v873, 124
        %v1503 = vpop.permute.xlu0 %1502
        %1504 = vrot.lane.b32.xlu0 %v876, 124
        %v1505 = vpop.permute.xlu0 %1504
        %1506 = vrot.lane.b32.xlu0 %v879, 124
        %v1507 = vpop.permute.xlu0 %1506
        %1508 = vrot.lane.b32.xlu0 %v882, 124
        %v1509 = vpop.permute.xlu0 %1508
        %1510 = vrot.lane.b32.xlu0 %v885, 124
        %v1511 = vpop.permute.xlu0 %1510
        %1512 = vrot.lane.b32.xlu0 %v888, 124
        %v1513 = vpop.permute.xlu0 %1512
        %1514 = vrot.lane.b32.xlu0 %v891, 124
        %v1515 = vpop.permute.xlu0 %1514
        %1516 = vrot.lane.b32.xlu0 %v894, 124
        %v1517 = vpop.permute.xlu0 %1516
        %1518 = vrot.lane.b32.xlu0 %v897, 124
        %v1519 = vpop.permute.xlu0 %1518
        %1520 = vrot.lane.b32.xlu0 %v900, 124
        %v1521 = vpop.permute.xlu0 %1520
        %1522 = vrot.lane.b32.xlu0 %v903, 124
        %v1523 = vpop.permute.xlu0 %1522
        %1524 = vrot.lane.b32.xlu0 %v906, 124
        %v1525 = vpop.permute.xlu0 %1524
        %1526 = vrot.lane.b32.xlu0 %v909, 124
        %v1527 = vpop.permute.xlu0 %1526
        %1528 = vrot.lane.b32.xlu0 %v912, 124
        %v1529 = vpop.permute.xlu0 %1528
        %1530 = vrot.lane.b32.xlu0 %v915, 124
        %v1531 = vpop.permute.xlu0 %1530
        %1532 = vrot.lane.b32.xlu0 %v918, 124
        %v1533 = vpop.permute.xlu0 %1532
        %1534 = vrot.lane.b32.xlu0 %v921, 124
        %v1535 = vpop.permute.xlu0 %1534
        %1536 = vrot.lane.b32.xlu0 %v924, 124
        %v1537 = vpop.permute.xlu0 %1536
        %1538 = vrot.lane.b32.xlu0 %v927, 124
        %v1539 = vpop.permute.xlu0 %1538
        %1540 = vrot.lane.b32.xlu0 %v930, 124
        %v1541 = vpop.permute.xlu0 %1540
        %1542 = vrot.lane.b32.xlu0 %v933, 124
        %v1543 = vpop.permute.xlu0 %1542
        %1544 = vrot.lane.b32.xlu0 %v936, 124
        %v1545 = vpop.permute.xlu0 %1544
        %1546 = vrot.lane.b32.xlu0 %v939, 124
        %v1547 = vpop.permute.xlu0 %1546
        %1548 = vrot.lane.b32.xlu0 %v942, 124
        %v1549 = vpop.permute.xlu0 %1548
        %1550 = vrot.lane.b32.xlu0 %v945, 124
        %v1551 = vpop.permute.xlu0 %1550
        %1552 = vrot.lane.b32.xlu0 %v948, 124
        %v1553 = vpop.permute.xlu0 %1552
        %1554 = vrot.lane.b32.xlu0 %v951, 124
        %v1555 = vpop.permute.xlu0 %1554
        %1556 = vrot.lane.b32.xlu0 %v954, 124
        %v1557 = vpop.permute.xlu0 %1556
        %1558 = vrot.lane.b32.xlu0 %v957, 124
        %v1559 = vpop.permute.xlu0 %1558
        %1560 = vrot.lane.b32.xlu0 %v960, 124
        %v1561 = vpop.permute.xlu0 %1560
        %1562 = vrot.lane.b32.xlu0 %v963, 124
        %v1563 = vpop.permute.xlu0 %1562
        %1564 = vrot.lane.b32.xlu0 %v966, 124
        %v1565 = vpop.permute.xlu0 %1564
        %1566 = vrot.lane.b32.xlu0 %v969, 124
        %v1567 = vpop.permute.xlu0 %1566
        %1568 = vrot.lane.b32.xlu0 %v972, 124
        %v1569 = vpop.permute.xlu0 %1568
        %1570 = vrot.lane.b32.xlu0 %v975, 124
        %v1571 = vpop.permute.xlu0 %1570
        %1572 = vrot.lane.b32.xlu0 %v978, 124
        %v1573 = vpop.permute.xlu0 %1572
        %1574 = vrot.lane.b32.xlu0 %v981, 124
        %v1575 = vpop.permute.xlu0 %1574
        %1576 = vrot.lane.b32.xlu0 %v984, 124
        %v1577 = vpop.permute.xlu0 %1576
        %1578 = vrot.lane.b32.xlu0 %v987, 124
        %v1579 = vpop.permute.xlu0 %1578
        %1580 = vrot.lane.b32.xlu0 %v990, 124
        %v1581 = vpop.permute.xlu0 %1580
        %1582 = vrot.lane.b32.xlu0 %v993, 124
        %v1583 = vpop.permute.xlu0 %1582
        %1584 = vrot.lane.b32.xlu0 %v996, 124
        %v1585 = vpop.permute.xlu0 %1584
        %1586 = vrot.lane.b32.xlu0 %v999, 124
        %v1587 = vpop.permute.xlu0 %1586
        %1588 = vrot.lane.b32.xlu0 %v1002, 124
        %v1589 = vpop.permute.xlu0 %1588
        %1590 = vrot.lane.b32.xlu0 %v1005, 124
        %v1591 = vpop.permute.xlu0 %1590
        %1592 = vrot.lane.b32.xlu0 %v1008, 124
        %v1593 = vpop.permute.xlu0 %1592
        %1594 = vrot.lane.b32.xlu0 %v1011, 124
        %v1595 = vpop.permute.xlu0 %1594
        %1596 = vrot.lane.b32.xlu0 %v1014, 124
        %v1597 = vpop.permute.xlu0 %1596
        %1598 = vrot.lane.b32.xlu0 %v1017, 124
        %v1599 = vpop.permute.xlu0 %1598
        %1600 = vrot.lane.b32.xlu0 %v1020, 124
        %v1601 = vpop.permute.xlu0 %1600
        %1602 = vrot.lane.b32.xlu0 %v1023, 124
        %v1603 = vpop.permute.xlu0 %1602
        %1604 = vrot.lane.b32.xlu0 %v1026, 124
        %v1605 = vpop.permute.xlu0 %1604
        %1606 = vrot.lane.b32.xlu0 %v1029, 124
        %v1607 = vpop.permute.xlu0 %1606
        %1608 = vrot.lane.b32.xlu0 %v1032, 124
        %v1609 = vpop.permute.xlu0 %1608
        %1610 = vrot.lane.b32.xlu0 %v1035, 124
        %v1611 = vpop.permute.xlu0 %1610
        %1612 = vrot.lane.b32.xlu0 %v1038, 124
        %v1613 = vpop.permute.xlu0 %1612
        %1614 = vrot.lane.b32.xlu0 %v1041, 124
        %v1615 = vpop.permute.xlu0 %1614
        %1616 = vrot.lane.b32.xlu0 %v1044, 124
        %v1617 = vpop.permute.xlu0 %1616
        %1618 = vrot.lane.b32.xlu0 %v1047, 124
        %v1619 = vpop.permute.xlu0 %1618
        %1620 = vrot.lane.b32.xlu0 %v1050, 124
        %v1621 = vpop.permute.xlu0 %1620
        %1622 = vrot.lane.b32.xlu0 %v1053, 124
        %v1623 = vpop.permute.xlu0 %1622
        %1624 = vrot.lane.b32.xlu0 %v1056, 124
        %v1625 = vpop.permute.xlu0 %1624
        %1626 = vrot.lane.b32.xlu0 %v1059, 124
        %v1627 = vpop.permute.xlu0 %1626
        %1628 = vrot.lane.b32.xlu0 %v1062, 124
        %v1629 = vpop.permute.xlu0 %1628
        %1630 = vrot.lane.b32.xlu0 %v1065, 124
        %v1631 = vpop.permute.xlu0 %1630
        %1632 = vrot.lane.b32.xlu0 %v1068, 124
        %v1633 = vpop.permute.xlu0 %1632
        %1634 = vrot.lane.b32.xlu0 %v1071, 124
        %v1635 = vpop.permute.xlu0 %1634
        %1636 = vrot.lane.b32.xlu0 %v1074, 124
        %v1637 = vpop.permute.xlu0 %1636
        %1638 = vrot.lane.b32.xlu0 %v1077, 124
        %v1639 = vpop.permute.xlu0 %1638
        %1640 = vrot.lane.b32.xlu0 %v1080, 124
        %v1641 = vpop.permute.xlu0 %1640
        %1642 = vrot.lane.b32.xlu0 %v1083, 124
        %v1643 = vpop.permute.xlu0 %1642
        %1644 = vrot.lane.b32.xlu0 %v1086, 124
        %v1645 = vpop.permute.xlu0 %1644
        %1646 = vrot.lane.b32.xlu0 %v1089, 124
        %v1647 = vpop.permute.xlu0 %1646
        %1648 = vrot.lane.b32.xlu0 %v1092, 124
        %v1649 = vpop.permute.xlu0 %1648
        %1650 = vrot.lane.b32.xlu0 %v1095, 124
        %v1651 = vpop.permute.xlu0 %1650
        %1652 = vrot.lane.b32.xlu0 %v1098, 124
        %v1653 = vpop.permute.xlu0 %1652
        %1654 = vrot.lane.b32.xlu0 %v1101, 124
        %v1655 = vpop.permute.xlu0 %1654
        %1656 = vrot.lane.b32.xlu0 %v1104, 124
        %v1657 = vpop.permute.xlu0 %1656
        %1658 = vrot.lane.b32.xlu0 %v1107, 124
        %v1659 = vpop.permute.xlu0 %1658
        %1660 = vrot.lane.b32.xlu0 %v1110, 124
        %v1661 = vpop.permute.xlu0 %1660
        %1662 = vrot.lane.b32.xlu0 %v1113, 124
        %v1663 = vpop.permute.xlu0 %1662
        %1664 = vrot.lane.b32.xlu0 %v1116, 124
        %v1665 = vpop.permute.xlu0 %1664
        %1666 = vrot.lane.b32.xlu0 %v1119, 124
        %v1667 = vpop.permute.xlu0 %1666
        %1668 = vrot.lane.b32.xlu0 %v1122, 124
        %v1669 = vpop.permute.xlu0 %1668
        %1670 = vrot.lane.b32.xlu0 %v1125, 124
        %v1671 = vpop.permute.xlu0 %1670
        %1672 = vrot.lane.b32.xlu0 %v1128, 124
        %v1673 = vpop.permute.xlu0 %1672
        %1674 = vrot.lane.b32.xlu0 %v1131, 124
        %v1675 = vpop.permute.xlu0 %1674
        %1676 = vrot.lane.b32.xlu0 %v1134, 124
        %v1677 = vpop.permute.xlu0 %1676
        %1678 = vrot.lane.b32.xlu0 %v1137, 124
        %v1679 = vpop.permute.xlu0 %1678
        %1680 = vrot.lane.b32.xlu0 %v1140, 124
        %v1681 = vpop.permute.xlu0 %1680
        %1682 = vrot.lane.b32.xlu0 %v1143, 124
        %v1683 = vpop.permute.xlu0 %1682
        %1684 = vrot.lane.b32.xlu0 %v1146, 124
        %v1685 = vpop.permute.xlu0 %1684
        %1686 = vrot.lane.b32.xlu0 %v1149, 124
        %v1687 = vpop.permute.xlu0 %1686
        %1688 = vrot.lane.b32.xlu0 %v1152, 124
        %v1689 = vpop.permute.xlu0 %1688
        %1690 = vrot.lane.b32.xlu0 %v1155, 124
        %v1691 = vpop.permute.xlu0 %1690
        %1692 = vrot.lane.b32.xlu0 %v1158, 124
        %v1693 = vpop.permute.xlu0 %1692
        %1694 = vrot.lane.b32.xlu0 %v1161, 124
        %v1695 = vpop.permute.xlu0 %1694
        %1696 = vrot.lane.b32.xlu0 %v1164, 124
        %v1697 = vpop.permute.xlu0 %1696
        %1698 = vrot.lane.b32.xlu0 %v1167, 124
        %v1699 = vpop.permute.xlu0 %1698
        %1700 = vrot.lane.b32.xlu0 %v1170, 124
        %v1701 = vpop.permute.xlu0 %1700
        %1702 = vrot.lane.b32.xlu0 %v1173, 124
        %v1703 = vpop.permute.xlu0 %1702
        %1704 = vrot.lane.b32.xlu0 %v1176, 124
        %v1705 = vpop.permute.xlu0 %1704
        %1706 = vrot.lane.b32.xlu0 %v1179, 124
        %v1707 = vpop.permute.xlu0 %1706
        %1708 = vrot.lane.b32.xlu0 %v1182, 124
        %v1709 = vpop.permute.xlu0 %1708
        %1710 = vrot.lane.b32.xlu0 %v1185, 124
        %v1711 = vpop.permute.xlu0 %1710
        %1712 = vrot.lane.b32.xlu0 %v1188, 124
        %v1713 = vpop.permute.xlu0 %1712
        %1714 = vrot.lane.b32.xlu0 %v1191, 124
        %v1715 = vpop.permute.xlu0 %1714
        %1716 = vrot.lane.b32.xlu0 %v1194, 124
        %v1717 = vpop.permute.xlu0 %1716
        %1718 = vrot.lane.b32.xlu0 %v1197, 124
        %v1719 = vpop.permute.xlu0 %1718
        %1720 = vrot.lane.b32.xlu0 %v1200, 124
        %v1721 = vpop.permute.xlu0 %1720
        %1722 = vrot.lane.b32.xlu0 %v1203, 124
        %v1723 = vpop.permute.xlu0 %1722
        %1724 = vrot.lane.b32.xlu0 %v1206, 124
        %v1725 = vpop.permute.xlu0 %1724
        %1726 = vrot.lane.b32.xlu0 %v1209, 124
        %v1727 = vpop.permute.xlu0 %1726
        %1728 = vrot.lane.b32.xlu0 %v1212, 124
        %v1729 = vpop.permute.xlu0 %1728
        %1730 = vrot.lane.b32.xlu0 %v1215, 124
        %v1731 = vpop.permute.xlu0 %1730
        %1732 = vrot.lane.b32.xlu0 %v1218, 124
        %v1733 = vpop.permute.xlu0 %1732
        %1734 = vrot.lane.b32.xlu0 %v1221, 124
        %v1735 = vpop.permute.xlu0 %1734
        %1864 = vxpose.xlu0.b32.start [1/16] %v1481, 128
        %1865 = vxpose.xlu0.b32.cont [2/16] %v1483, 128
        %1866 = vxpose.xlu0.b32.cont [3/16] %v1485, 128
        %1867 = vxpose.xlu0.b32.cont [4/16] %v1487, 128
        %1868 = vxpose.xlu0.b32.cont [5/16] %v1489, 128
        %1869 = vxpose.xlu0.b32.cont [6/16] %v1491, 128
        %1870 = vxpose.xlu0.b32.cont [7/16] %v1493, 128
        %1871 = vxpose.xlu0.b32.cont [8/16] %v1495, 128
        %1872 = vxpose.xlu0.b32.cont [9/16] %v1497, 128
        %1873 = vxpose.xlu0.b32.cont [10/16] %v1499, 128
        %1874 = vxpose.xlu0.b32.cont [11/16] %v1501, 128
        %1875 = vxpose.xlu0.b32.cont [12/16] %v1503, 128
        %1876 = vxpose.xlu0.b32.cont [13/16] %v1505, 128
        %1877 = vxpose.xlu0.b32.cont [14/16] %v1507, 128
        %1878 = vxpose.xlu0.b32.cont [15/16] %v1509, 128
        %1879 = vxpose.xlu0.b32.end [16/16] %v1511, 128
        %v1880 = vpop.trf.xlu0
        %v1881 = vpop.trf.xlu0
        %v1882 = vpop.trf.xlu0
        %v1883 = vpop.trf.xlu0
        %v1884 = vpop.trf.xlu0
        %v1885 = vpop.trf.xlu0
        %v1886 = vpop.trf.xlu0
        %v1887 = vpop.trf.xlu0
        %v1888 = vpop.trf.xlu0
        %v1889 = vpop.trf.xlu0
        %v1890 = vpop.trf.xlu0
        %v1891 = vpop.trf.xlu0
        %v1892 = vpop.trf.xlu0
        %v1893 = vpop.trf.xlu0
        %v1894 = vpop.trf.xlu0
        %v1895 = vpop.trf.xlu0
        %1896 = vxpose.xlu0.b32.start [1/16] %v1513, 128
        %1897 = vxpose.xlu0.b32.cont [2/16] %v1515, 128
        %1898 = vxpose.xlu0.b32.cont [3/16] %v1517, 128
        %1899 = vxpose.xlu0.b32.cont [4/16] %v1519, 128
        %1900 = vxpose.xlu0.b32.cont [5/16] %v1521, 128
        %1901 = vxpose.xlu0.b32.cont [6/16] %v1523, 128
        %1902 = vxpose.xlu0.b32.cont [7/16] %v1525, 128
        %1903 = vxpose.xlu0.b32.cont [8/16] %v1527, 128
        %1904 = vxpose.xlu0.b32.cont [9/16] %v1529, 128
        %1905 = vxpose.xlu0.b32.cont [10/16] %v1531, 128
        %1906 = vxpose.xlu0.b32.cont [11/16] %v1533, 128
        %1907 = vxpose.xlu0.b32.cont [12/16] %v1535, 128
        %1908 = vxpose.xlu0.b32.cont [13/16] %v1537, 128
        %1909 = vxpose.xlu0.b32.cont [14/16] %v1539, 128
        %1910 = vxpose.xlu0.b32.cont [15/16] %v1541, 128
        %1911 = vxpose.xlu0.b32.end [16/16] %v1543, 128
        %v1912 = vpop.trf.xlu0
        %v1913 = vpop.trf.xlu0
        %v1914 = vpop.trf.xlu0
        %v1915 = vpop.trf.xlu0
        %v1916 = vpop.trf.xlu0
        %v1917 = vpop.trf.xlu0
        %v1918 = vpop.trf.xlu0
        %v1919 = vpop.trf.xlu0
        %v1920 = vpop.trf.xlu0
        %v1921 = vpop.trf.xlu0
        %v1922 = vpop.trf.xlu0
        %v1923 = vpop.trf.xlu0
        %v1924 = vpop.trf.xlu0
        %v1925 = vpop.trf.xlu0
        %v1926 = vpop.trf.xlu0
        %v1927 = vpop.trf.xlu0
        %1928 = vxpose.xlu0.b32.start [1/16] %v1545, 128
        %1929 = vxpose.xlu0.b32.cont [2/16] %v1547, 128
        %1930 = vxpose.xlu0.b32.cont [3/16] %v1549, 128
        %1931 = vxpose.xlu0.b32.cont [4/16] %v1551, 128
        %1932 = vxpose.xlu0.b32.cont [5/16] %v1553, 128
        %1933 = vxpose.xlu0.b32.cont [6/16] %v1555, 128
        %1934 = vxpose.xlu0.b32.cont [7/16] %v1557, 128
        %1935 = vxpose.xlu0.b32.cont [8/16] %v1559, 128
        %1936 = vxpose.xlu0.b32.cont [9/16] %v1561, 128
        %1937 = vxpose.xlu0.b32.cont [10/16] %v1563, 128
        %1938 = vxpose.xlu0.b32.cont [11/16] %v1565, 128
        %1939 = vxpose.xlu0.b32.cont [12/16] %v1567, 128
        %1940 = vxpose.xlu0.b32.cont [13/16] %v1569, 128
        %1941 = vxpose.xlu0.b32.cont [14/16] %v1571, 128
        %1942 = vxpose.xlu0.b32.cont [15/16] %v1573, 128
        %1943 = vxpose.xlu0.b32.end [16/16] %v1575, 128
        %v1944 = vpop.trf.xlu0
        %v1945 = vpop.trf.xlu0
        %v1946 = vpop.trf.xlu0
        %v1947 = vpop.trf.xlu0
        %v1948 = vpop.trf.xlu0
        %v1949 = vpop.trf.xlu0
        %v1950 = vpop.trf.xlu0
        %v1951 = vpop.trf.xlu0
        %v1952 = vpop.trf.xlu0
        %v1953 = vpop.trf.xlu0
        %v1954 = vpop.trf.xlu0
        %v1955 = vpop.trf.xlu0
        %v1956 = vpop.trf.xlu0
        %v1957 = vpop.trf.xlu0
        %v1958 = vpop.trf.xlu0
        %v1959 = vpop.trf.xlu0
        %1960 = vxpose.xlu0.b32.start [1/16] %v1577, 128
        %1961 = vxpose.xlu0.b32.cont [2/16] %v1579, 128
        %1962 = vxpose.xlu0.b32.cont [3/16] %v1581, 128
        %1963 = vxpose.xlu0.b32.cont [4/16] %v1583, 128
        %1964 = vxpose.xlu0.b32.cont [5/16] %v1585, 128
        %1965 = vxpose.xlu0.b32.cont [6/16] %v1587, 128
        %1966 = vxpose.xlu0.b32.cont [7/16] %v1589, 128
        %1967 = vxpose.xlu0.b32.cont [8/16] %v1591, 128
        %1968 = vxpose.xlu0.b32.cont [9/16] %v1593, 128
        %1969 = vxpose.xlu0.b32.cont [10/16] %v1595, 128
        %1970 = vxpose.xlu0.b32.cont [11/16] %v1597, 128
        %1971 = vxpose.xlu0.b32.cont [12/16] %v1599, 128
        %1972 = vxpose.xlu0.b32.cont [13/16] %v1601, 128
        %1973 = vxpose.xlu0.b32.cont [14/16] %v1603, 128
        %1974 = vxpose.xlu0.b32.cont [15/16] %v1605, 128
        %1975 = vxpose.xlu0.b32.end [16/16] %v1607, 128
        %v1976 = vpop.trf.xlu0
        %v1977 = vpop.trf.xlu0
        %v1978 = vpop.trf.xlu0
        %v1979 = vpop.trf.xlu0
        %v1980 = vpop.trf.xlu0
        %v1981 = vpop.trf.xlu0
        %v1982 = vpop.trf.xlu0
        %v1983 = vpop.trf.xlu0
        %v1984 = vpop.trf.xlu0
        %v1985 = vpop.trf.xlu0
        %v1986 = vpop.trf.xlu0
        %v1987 = vpop.trf.xlu0
        %v1988 = vpop.trf.xlu0
        %v1989 = vpop.trf.xlu0
        %v1990 = vpop.trf.xlu0
        %v1991 = vpop.trf.xlu0
        %1992 = vxpose.xlu0.b32.start [1/16] %v1609, 128
        %1993 = vxpose.xlu0.b32.cont [2/16] %v1611, 128
        %1994 = vxpose.xlu0.b32.cont [3/16] %v1613, 128
        %1995 = vxpose.xlu0.b32.cont [4/16] %v1615, 128
        %1996 = vxpose.xlu0.b32.cont [5/16] %v1617, 128
        %1997 = vxpose.xlu0.b32.cont [6/16] %v1619, 128
        %1998 = vxpose.xlu0.b32.cont [7/16] %v1621, 128
        %1999 = vxpose.xlu0.b32.cont [8/16] %v1623, 128
        %2000 = vxpose.xlu0.b32.cont [9/16] %v1625, 128
        %2001 = vxpose.xlu0.b32.cont [10/16] %v1627, 128
        %2002 = vxpose.xlu0.b32.cont [11/16] %v1629, 128
        %2003 = vxpose.xlu0.b32.cont [12/16] %v1631, 128
        %2004 = vxpose.xlu0.b32.cont [13/16] %v1633, 128
        %2005 = vxpose.xlu0.b32.cont [14/16] %v1635, 128
        %2006 = vxpose.xlu0.b32.cont [15/16] %v1637, 128
        %2007 = vxpose.xlu0.b32.end [16/16] %v1639, 128
        %v2008 = vpop.trf.xlu0
        %v2009 = vpop.trf.xlu0
        %v2010 = vpop.trf.xlu0
        %v2011 = vpop.trf.xlu0
        %v2012 = vpop.trf.xlu0
        %v2013 = vpop.trf.xlu0
        %v2014 = vpop.trf.xlu0
        %v2015 = vpop.trf.xlu0
        %v2016 = vpop.trf.xlu0
        %v2017 = vpop.trf.xlu0
        %v2018 = vpop.trf.xlu0
        %v2019 = vpop.trf.xlu0
        %v2020 = vpop.trf.xlu0
        %v2021 = vpop.trf.xlu0
        %v2022 = vpop.trf.xlu0
        %v2023 = vpop.trf.xlu0
        %2024 = vxpose.xlu0.b32.start [1/16] %v1641, 128
        %2025 = vxpose.xlu0.b32.cont [2/16] %v1643, 128
        %2026 = vxpose.xlu0.b32.cont [3/16] %v1645, 128
        %2027 = vxpose.xlu0.b32.cont [4/16] %v1647, 128
        %2028 = vxpose.xlu0.b32.cont [5/16] %v1649, 128
        %2029 = vxpose.xlu0.b32.cont [6/16] %v1651, 128
        %2030 = vxpose.xlu0.b32.cont [7/16] %v1653, 128
        %2031 = vxpose.xlu0.b32.cont [8/16] %v1655, 128
        %2032 = vxpose.xlu0.b32.cont [9/16] %v1657, 128
        %2033 = vxpose.xlu0.b32.cont [10/16] %v1659, 128
        %2034 = vxpose.xlu0.b32.cont [11/16] %v1661, 128
        %2035 = vxpose.xlu0.b32.cont [12/16] %v1663, 128
        %2036 = vxpose.xlu0.b32.cont [13/16] %v1665, 128
        %2037 = vxpose.xlu0.b32.cont [14/16] %v1667, 128
        %2038 = vxpose.xlu0.b32.cont [15/16] %v1669, 128
        %2039 = vxpose.xlu0.b32.end [16/16] %v1671, 128
        %v2040 = vpop.trf.xlu0
        %v2041 = vpop.trf.xlu0
        %v2042 = vpop.trf.xlu0
        %v2043 = vpop.trf.xlu0
        %v2044 = vpop.trf.xlu0
        %v2045 = vpop.trf.xlu0
        %v2046 = vpop.trf.xlu0
        %v2047 = vpop.trf.xlu0
        %v2048 = vpop.trf.xlu0
        %v2049 = vpop.trf.xlu0
        %v2050 = vpop.trf.xlu0
        %v2051 = vpop.trf.xlu0
        %v2052 = vpop.trf.xlu0
        %v2053 = vpop.trf.xlu0
        %v2054 = vpop.trf.xlu0
        %v2055 = vpop.trf.xlu0
        %2056 = vxpose.xlu0.b32.start [1/16] %v1673, 128
        %2057 = vxpose.xlu0.b32.cont [2/16] %v1675, 128
        %2058 = vxpose.xlu0.b32.cont [3/16] %v1677, 128
        %2059 = vxpose.xlu0.b32.cont [4/16] %v1679, 128
        %2060 = vxpose.xlu0.b32.cont [5/16] %v1681, 128
        %2061 = vxpose.xlu0.b32.cont [6/16] %v1683, 128
        %2062 = vxpose.xlu0.b32.cont [7/16] %v1685, 128
        %2063 = vxpose.xlu0.b32.cont [8/16] %v1687, 128
        %2064 = vxpose.xlu0.b32.cont [9/16] %v1689, 128
        %2065 = vxpose.xlu0.b32.cont [10/16] %v1691, 128
        %2066 = vxpose.xlu0.b32.cont [11/16] %v1693, 128
        %2067 = vxpose.xlu0.b32.cont [12/16] %v1695, 128
        %2068 = vxpose.xlu0.b32.cont [13/16] %v1697, 128
        %2069 = vxpose.xlu0.b32.cont [14/16] %v1699, 128
        %2070 = vxpose.xlu0.b32.cont [15/16] %v1701, 128
        %2071 = vxpose.xlu0.b32.end [16/16] %v1703, 128
        %v2072 = vpop.trf.xlu0
        %v2073 = vpop.trf.xlu0
        %v2074 = vpop.trf.xlu0
        %v2075 = vpop.trf.xlu0
        %v2076 = vpop.trf.xlu0
        %v2077 = vpop.trf.xlu0
        %v2078 = vpop.trf.xlu0
        %v2079 = vpop.trf.xlu0
        %v2080 = vpop.trf.xlu0
        %v2081 = vpop.trf.xlu0
        %v2082 = vpop.trf.xlu0
        %v2083 = vpop.trf.xlu0
        %v2084 = vpop.trf.xlu0
        %v2085 = vpop.trf.xlu0
        %v2086 = vpop.trf.xlu0
        %v2087 = vpop.trf.xlu0
        %2088 = vxpose.xlu0.b32.start [1/16] %v1705, 128
        %2089 = vxpose.xlu0.b32.cont [2/16] %v1707, 128
        %2090 = vxpose.xlu0.b32.cont [3/16] %v1709, 128
        %2091 = vxpose.xlu0.b32.cont [4/16] %v1711, 128
        %2092 = vxpose.xlu0.b32.cont [5/16] %v1713, 128
        %2093 = vxpose.xlu0.b32.cont [6/16] %v1715, 128
        %2094 = vxpose.xlu0.b32.cont [7/16] %v1717, 128
        %2095 = vxpose.xlu0.b32.cont [8/16] %v1719, 128
        %2096 = vxpose.xlu0.b32.cont [9/16] %v1721, 128
        %2097 = vxpose.xlu0.b32.cont [10/16] %v1723, 128
        %2098 = vxpose.xlu0.b32.cont [11/16] %v1725, 128
        %2099 = vxpose.xlu0.b32.cont [12/16] %v1727, 128
        %2100 = vxpose.xlu0.b32.cont [13/16] %v1729, 128
        %2101 = vxpose.xlu0.b32.cont [14/16] %v1731, 128
        %2102 = vxpose.xlu0.b32.cont [15/16] %v1733, 128
        %2103 = vxpose.xlu0.b32.end [16/16] %v1735, 128
        %v2104 = vpop.trf.xlu0
        %v2105 = vpop.trf.xlu0
        %v2106 = vpop.trf.xlu0
        %v2107 = vpop.trf.xlu0
        %v2108 = vpop.trf.xlu0
        %v2109 = vpop.trf.xlu0
        %v2110 = vpop.trf.xlu0
        %v2111 = vpop.trf.xlu0
        %v2112 = vpop.trf.xlu0
        %v2113 = vpop.trf.xlu0
        %v2114 = vpop.trf.xlu0
        %v2115 = vpop.trf.xlu0
        %v2116 = vpop.trf.xlu0
        %v2117 = vpop.trf.xlu0
        %v2118 = vpop.trf.xlu0
        %v2119 = vpop.trf.xlu0
        %v2128 = vrot.slane %v1912, 4
        %v2129 = vrot.slane %v1976, 4
        %v2130 = vrot.slane %v2040, 4
        %v2131 = vrot.slane %v2104, 4
        %vm2132 = vcmask 1043456
        %v2133 = vsel %vm2132, %v1880, %v2128
        %v2134 = vsel %vm2132, %v1944, %v2129
        %v2135 = vsel %vm2132, %v2008, %v2130
        %v2136 = vsel %vm2132, %v2072, %v2131
        %2141 = vst [vmem:[%s258] sm:$0xff] %v2133
        %2142 = vst [vmem:[%s258 + $0x8] sm:$0xff] %v2134
        %2143 = vst [vmem:[%s258 + $0x10] sm:$0xff] %v2135
        %2144 = vst [vmem:[%s258 + $0x18] sm:$0xff] %v2136
        %2145 = vrot.lane.b32.xlu0 %v840, 120
        %v2146 = vpop.permute.xlu0 %2145
        %2147 = vrot.lane.b32.xlu0 %v843, 120
        %v2148 = vpop.permute.xlu0 %2147
        %2149 = vrot.lane.b32.xlu0 %v846, 120
        %v2150 = vpop.permute.xlu0 %2149
        %2151 = vrot.lane.b32.xlu0 %v849, 120
        %v2152 = vpop.permute.xlu0 %2151
        %2153 = vrot.lane.b32.xlu0 %v852, 120
        %v2154 = vpop.permute.xlu0 %2153
        %2155 = vrot.lane.b32.xlu0 %v855, 120
        %v2156 = vpop.permute.xlu0 %2155
        %2157 = vrot.lane.b32.xlu0 %v858, 120
        %v2158 = vpop.permute.xlu0 %2157
        %2159 = vrot.lane.b32.xlu0 %v861, 120
        %v2160 = vpop.permute.xlu0 %2159
        %2161 = vrot.lane.b32.xlu0 %v864, 120
        %v2162 = vpop.permute.xlu0 %2161
        %2163 = vrot.lane.b32.xlu0 %v867, 120
        %v2164 = vpop.permute.xlu0 %2163
        %2165 = vrot.lane.b32.xlu0 %v870, 120
        %v2166 = vpop.permute.xlu0 %2165
        %2167 = vrot.lane.b32.xlu0 %v873, 120
        %v2168 = vpop.permute.xlu0 %2167
        %2169 = vrot.lane.b32.xlu0 %v876, 120
        %v2170 = vpop.permute.xlu0 %2169
        %2171 = vrot.lane.b32.xlu0 %v879, 120
        %v2172 = vpop.permute.xlu0 %2171
        %2173 = vrot.lane.b32.xlu0 %v882, 120
        %v2174 = vpop.permute.xlu0 %2173
        %2175 = vrot.lane.b32.xlu0 %v885, 120
        %v2176 = vpop.permute.xlu0 %2175
        %2177 = vrot.lane.b32.xlu0 %v888, 120
        %v2178 = vpop.permute.xlu0 %2177
        %2179 = vrot.lane.b32.xlu0 %v891, 120
        %v2180 = vpop.permute.xlu0 %2179
        %2181 = vrot.lane.b32.xlu0 %v894, 120
        %v2182 = vpop.permute.xlu0 %2181
        %2183 = vrot.lane.b32.xlu0 %v897, 120
        %v2184 = vpop.permute.xlu0 %2183
        %2185 = vrot.lane.b32.xlu0 %v900, 120
        %v2186 = vpop.permute.xlu0 %2185
        %2187 = vrot.lane.b32.xlu0 %v903, 120
        %v2188 = vpop.permute.xlu0 %2187
        %2189 = vrot.lane.b32.xlu0 %v906, 120
        %v2190 = vpop.permute.xlu0 %2189
        %2191 = vrot.lane.b32.xlu0 %v909, 120
        %v2192 = vpop.permute.xlu0 %2191
        %2193 = vrot.lane.b32.xlu0 %v912, 120
        %v2194 = vpop.permute.xlu0 %2193
        %2195 = vrot.lane.b32.xlu0 %v915, 120
        %v2196 = vpop.permute.xlu0 %2195
        %2197 = vrot.lane.b32.xlu0 %v918, 120
        %v2198 = vpop.permute.xlu0 %2197
        %2199 = vrot.lane.b32.xlu0 %v921, 120
        %v2200 = vpop.permute.xlu0 %2199
        %2201 = vrot.lane.b32.xlu0 %v924, 120
        %v2202 = vpop.permute.xlu0 %2201
        %2203 = vrot.lane.b32.xlu0 %v927, 120
        %v2204 = vpop.permute.xlu0 %2203
        %2205 = vrot.lane.b32.xlu0 %v930, 120
        %v2206 = vpop.permute.xlu0 %2205
        %2207 = vrot.lane.b32.xlu0 %v933, 120
        %v2208 = vpop.permute.xlu0 %2207
        %2209 = vrot.lane.b32.xlu0 %v936, 120
        %v2210 = vpop.permute.xlu0 %2209
        %2211 = vrot.lane.b32.xlu0 %v939, 120
        %v2212 = vpop.permute.xlu0 %2211
        %2213 = vrot.lane.b32.xlu0 %v942, 120
        %v2214 = vpop.permute.xlu0 %2213
        %2215 = vrot.lane.b32.xlu0 %v945, 120
        %v2216 = vpop.permute.xlu0 %2215
        %2217 = vrot.lane.b32.xlu0 %v948, 120
        %v2218 = vpop.permute.xlu0 %2217
        %2219 = vrot.lane.b32.xlu0 %v951, 120
        %v2220 = vpop.permute.xlu0 %2219
        %2221 = vrot.lane.b32.xlu0 %v954, 120
        %v2222 = vpop.permute.xlu0 %2221
        %2223 = vrot.lane.b32.xlu0 %v957, 120
        %v2224 = vpop.permute.xlu0 %2223
        %2225 = vrot.lane.b32.xlu0 %v960, 120
        %v2226 = vpop.permute.xlu0 %2225
        %2227 = vrot.lane.b32.xlu0 %v963, 120
        %v2228 = vpop.permute.xlu0 %2227
        %2229 = vrot.lane.b32.xlu0 %v966, 120
        %v2230 = vpop.permute.xlu0 %2229
        %2231 = vrot.lane.b32.xlu0 %v969, 120
        %v2232 = vpop.permute.xlu0 %2231
        %2233 = vrot.lane.b32.xlu0 %v972, 120
        %v2234 = vpop.permute.xlu0 %2233
        %2235 = vrot.lane.b32.xlu0 %v975, 120
        %v2236 = vpop.permute.xlu0 %2235
        %2237 = vrot.lane.b32.xlu0 %v978, 120
        %v2238 = vpop.permute.xlu0 %2237
        %2239 = vrot.lane.b32.xlu0 %v981, 120
        %v2240 = vpop.permute.xlu0 %2239
        %2241 = vrot.lane.b32.xlu0 %v984, 120
        %v2242 = vpop.permute.xlu0 %2241
        %2243 = vrot.lane.b32.xlu0 %v987, 120
        %v2244 = vpop.permute.xlu0 %2243
        %2245 = vrot.lane.b32.xlu0 %v990, 120
        %v2246 = vpop.permute.xlu0 %2245
        %2247 = vrot.lane.b32.xlu0 %v993, 120
        %v2248 = vpop.permute.xlu0 %2247
        %2249 = vrot.lane.b32.xlu0 %v996, 120
        %v2250 = vpop.permute.xlu0 %2249
        %2251 = vrot.lane.b32.xlu0 %v999, 120
        %v2252 = vpop.permute.xlu0 %2251
        %2253 = vrot.lane.b32.xlu0 %v1002, 120
        %v2254 = vpop.permute.xlu0 %2253
        %2255 = vrot.lane.b32.xlu0 %v1005, 120
        %v2256 = vpop.permute.xlu0 %2255
        %2257 = vrot.lane.b32.xlu0 %v1008, 120
        %v2258 = vpop.permute.xlu0 %2257
        %2259 = vrot.lane.b32.xlu0 %v1011, 120
        %v2260 = vpop.permute.xlu0 %2259
        %2261 = vrot.lane.b32.xlu0 %v1014, 120
        %v2262 = vpop.permute.xlu0 %2261
        %2263 = vrot.lane.b32.xlu0 %v1017, 120
        %v2264 = vpop.permute.xlu0 %2263
        %2265 = vrot.lane.b32.xlu0 %v1020, 120
        %v2266 = vpop.permute.xlu0 %2265
        %2267 = vrot.lane.b32.xlu0 %v1023, 120
        %v2268 = vpop.permute.xlu0 %2267
        %2269 = vrot.lane.b32.xlu0 %v1026, 120
        %v2270 = vpop.permute.xlu0 %2269
        %2271 = vrot.lane.b32.xlu0 %v1029, 120
        %v2272 = vpop.permute.xlu0 %2271
        %2273 = vrot.lane.b32.xlu0 %v1032, 120
        %v2274 = vpop.permute.xlu0 %2273
        %2275 = vrot.lane.b32.xlu0 %v1035, 120
        %v2276 = vpop.permute.xlu0 %2275
        %2277 = vrot.lane.b32.xlu0 %v1038, 120
        %v2278 = vpop.permute.xlu0 %2277
        %2279 = vrot.lane.b32.xlu0 %v1041, 120
        %v2280 = vpop.permute.xlu0 %2279
        %2281 = vrot.lane.b32.xlu0 %v1044, 120
        %v2282 = vpop.permute.xlu0 %2281
        %2283 = vrot.lane.b32.xlu0 %v1047, 120
        %v2284 = vpop.permute.xlu0 %2283
        %2285 = vrot.lane.b32.xlu0 %v1050, 120
        %v2286 = vpop.permute.xlu0 %2285
        %2287 = vrot.lane.b32.xlu0 %v1053, 120
        %v2288 = vpop.permute.xlu0 %2287
        %2289 = vrot.lane.b32.xlu0 %v1056, 120
        %v2290 = vpop.permute.xlu0 %2289
        %2291 = vrot.lane.b32.xlu0 %v1059, 120
        %v2292 = vpop.permute.xlu0 %2291
        %2293 = vrot.lane.b32.xlu0 %v1062, 120
        %v2294 = vpop.permute.xlu0 %2293
        %2295 = vrot.lane.b32.xlu0 %v1065, 120
        %v2296 = vpop.permute.xlu0 %2295
        %2297 = vrot.lane.b32.xlu0 %v1068, 120
        %v2298 = vpop.permute.xlu0 %2297
        %2299 = vrot.lane.b32.xlu0 %v1071, 120
        %v2300 = vpop.permute.xlu0 %2299
        %2301 = vrot.lane.b32.xlu0 %v1074, 120
        %v2302 = vpop.permute.xlu0 %2301
        %2303 = vrot.lane.b32.xlu0 %v1077, 120
        %v2304 = vpop.permute.xlu0 %2303
        %2305 = vrot.lane.b32.xlu0 %v1080, 120
        %v2306 = vpop.permute.xlu0 %2305
        %2307 = vrot.lane.b32.xlu0 %v1083, 120
        %v2308 = vpop.permute.xlu0 %2307
        %2309 = vrot.lane.b32.xlu0 %v1086, 120
        %v2310 = vpop.permute.xlu0 %2309
        %2311 = vrot.lane.b32.xlu0 %v1089, 120
        %v2312 = vpop.permute.xlu0 %2311
        %2313 = vrot.lane.b32.xlu0 %v1092, 120
        %v2314 = vpop.permute.xlu0 %2313
        %2315 = vrot.lane.b32.xlu0 %v1095, 120
        %v2316 = vpop.permute.xlu0 %2315
        %2317 = vrot.lane.b32.xlu0 %v1098, 120
        %v2318 = vpop.permute.xlu0 %2317
        %2319 = vrot.lane.b32.xlu0 %v1101, 120
        %v2320 = vpop.permute.xlu0 %2319
        %2321 = vrot.lane.b32.xlu0 %v1104, 120
        %v2322 = vpop.permute.xlu0 %2321
        %2323 = vrot.lane.b32.xlu0 %v1107, 120
        %v2324 = vpop.permute.xlu0 %2323
        %2325 = vrot.lane.b32.xlu0 %v1110, 120
        %v2326 = vpop.permute.xlu0 %2325
        %2327 = vrot.lane.b32.xlu0 %v1113, 120
        %v2328 = vpop.permute.xlu0 %2327
        %2329 = vrot.lane.b32.xlu0 %v1116, 120
        %v2330 = vpop.permute.xlu0 %2329
        %2331 = vrot.lane.b32.xlu0 %v1119, 120
        %v2332 = vpop.permute.xlu0 %2331
        %2333 = vrot.lane.b32.xlu0 %v1122, 120
        %v2334 = vpop.permute.xlu0 %2333
        %2335 = vrot.lane.b32.xlu0 %v1125, 120
        %v2336 = vpop.permute.xlu0 %2335
        %2337 = vrot.lane.b32.xlu0 %v1128, 120
        %v2338 = vpop.permute.xlu0 %2337
        %2339 = vrot.lane.b32.xlu0 %v1131, 120
        %v2340 = vpop.permute.xlu0 %2339
        %2341 = vrot.lane.b32.xlu0 %v1134, 120
        %v2342 = vpop.permute.xlu0 %2341
        %2343 = vrot.lane.b32.xlu0 %v1137, 120
        %v2344 = vpop.permute.xlu0 %2343
        %2345 = vrot.lane.b32.xlu0 %v1140, 120
        %v2346 = vpop.permute.xlu0 %2345
        %2347 = vrot.lane.b32.xlu0 %v1143, 120
        %v2348 = vpop.permute.xlu0 %2347
        %2349 = vrot.lane.b32.xlu0 %v1146, 120
        %v2350 = vpop.permute.xlu0 %2349
        %2351 = vrot.lane.b32.xlu0 %v1149, 120
        %v2352 = vpop.permute.xlu0 %2351
        %2353 = vrot.lane.b32.xlu0 %v1152, 120
        %v2354 = vpop.permute.xlu0 %2353
        %2355 = vrot.lane.b32.xlu0 %v1155, 120
        %v2356 = vpop.permute.xlu0 %2355
        %2357 = vrot.lane.b32.xlu0 %v1158, 120
        %v2358 = vpop.permute.xlu0 %2357
        %2359 = vrot.lane.b32.xlu0 %v1161, 120
        %v2360 = vpop.permute.xlu0 %2359
        %2361 = vrot.lane.b32.xlu0 %v1164, 120
        %v2362 = vpop.permute.xlu0 %2361
        %2363 = vrot.lane.b32.xlu0 %v1167, 120
        %v2364 = vpop.permute.xlu0 %2363
        %2365 = vrot.lane.b32.xlu0 %v1170, 120
        %v2366 = vpop.permute.xlu0 %2365
        %2367 = vrot.lane.b32.xlu0 %v1173, 120
        %v2368 = vpop.permute.xlu0 %2367
        %2369 = vrot.lane.b32.xlu0 %v1176, 120
        %v2370 = vpop.permute.xlu0 %2369
        %2371 = vrot.lane.b32.xlu0 %v1179, 120
        %v2372 = vpop.permute.xlu0 %2371
        %2373 = vrot.lane.b32.xlu0 %v1182, 120
        %v2374 = vpop.permute.xlu0 %2373
        %2375 = vrot.lane.b32.xlu0 %v1185, 120
        %v2376 = vpop.permute.xlu0 %2375
        %2377 = vrot.lane.b32.xlu0 %v1188, 120
        %v2378 = vpop.permute.xlu0 %2377
        %2379 = vrot.lane.b32.xlu0 %v1191, 120
        %v2380 = vpop.permute.xlu0 %2379
        %2381 = vrot.lane.b32.xlu0 %v1194, 120
        %v2382 = vpop.permute.xlu0 %2381
        %2383 = vrot.lane.b32.xlu0 %v1197, 120
        %v2384 = vpop.permute.xlu0 %2383
        %2385 = vrot.lane.b32.xlu0 %v1200, 120
        %v2386 = vpop.permute.xlu0 %2385
        %2387 = vrot.lane.b32.xlu0 %v1203, 120
        %v2388 = vpop.permute.xlu0 %2387
        %2389 = vrot.lane.b32.xlu0 %v1206, 120
        %v2390 = vpop.permute.xlu0 %2389
        %2391 = vrot.lane.b32.xlu0 %v1209, 120
        %v2392 = vpop.permute.xlu0 %2391
        %2393 = vrot.lane.b32.xlu0 %v1212, 120
        %v2394 = vpop.permute.xlu0 %2393
        %2395 = vrot.lane.b32.xlu0 %v1215, 120
        %v2396 = vpop.permute.xlu0 %2395
        %2397 = vrot.lane.b32.xlu0 %v1218, 120
        %v2398 = vpop.permute.xlu0 %2397
        %2399 = vrot.lane.b32.xlu0 %v1221, 120
        %v2400 = vpop.permute.xlu0 %2399
        %2529 = vst.msk [vmem:[%s299] sm:$0xff] %vm437, %v2146
        %2530 = vst.msk [vmem:[%s299 + $0x8] sm:$0xff] %vm437, %v2148
        %2531 = vst.msk [vmem:[%s299 + $0x10] sm:$0xff] %vm437, %v2150
        %2532 = vst.msk [vmem:[%s299 + $0x18] sm:$0xff] %vm437, %v2152
        %2533 = vst.msk [vmem:[%s299 + $0x20] sm:$0xff] %vm437, %v2154
        %2534 = vst.msk [vmem:[%s299 + $0x28] sm:$0xff] %vm437, %v2156
        %2535 = vst.msk [vmem:[%s299 + $0x30] sm:$0xff] %vm437, %v2158
        %2536 = vst.msk [vmem:[%s299 + $0x38] sm:$0xff] %vm437, %v2160
        %2537 = vst.msk [vmem:[%s299 + $0x40] sm:$0xff] %vm437, %v2162
        %2538 = vst.msk [vmem:[%s299 + $0x48] sm:$0xff] %vm437, %v2164
        %2539 = vst.msk [vmem:[%s299 + $0x50] sm:$0xff] %vm437, %v2166
        %2540 = vst.msk [vmem:[%s299 + $0x58] sm:$0xff] %vm437, %v2168
        %2541 = vst.msk [vmem:[%s299 + $0x60] sm:$0xff] %vm437, %v2170
        %2542 = vst.msk [vmem:[%s299 + $0x68] sm:$0xff] %vm437, %v2172
        %2543 = vst.msk [vmem:[%s299 + $0x70] sm:$0xff] %vm437, %v2174
        %2544 = vst.msk [vmem:[%s299 + $0x78] sm:$0xff] %vm437, %v2176
        %2545 = vst.msk [vmem:[%s299 + $0x80] sm:$0xff] %vm437, %v2178
        %2546 = vst.msk [vmem:[%s299 + $0x88] sm:$0xff] %vm437, %v2180
        %2547 = vst.msk [vmem:[%s299 + $0x90] sm:$0xff] %vm437, %v2182
        %2548 = vst.msk [vmem:[%s299 + $0x98] sm:$0xff] %vm437, %v2184
        %2549 = vst.msk [vmem:[%s299 + $0xa0] sm:$0xff] %vm437, %v2186
        %2550 = vst.msk [vmem:[%s299 + $0xa8] sm:$0xff] %vm437, %v2188
        %2551 = vst.msk [vmem:[%s299 + $0xb0] sm:$0xff] %vm437, %v2190
        %2552 = vst.msk [vmem:[%s299 + $0xb8] sm:$0xff] %vm437, %v2192
        %2553 = vst.msk [vmem:[%s299 + $0xc0] sm:$0xff] %vm437, %v2194
        %2554 = vst.msk [vmem:[%s299 + $0xc8] sm:$0xff] %vm437, %v2196
        %2555 = vst.msk [vmem:[%s299 + $0xd0] sm:$0xff] %vm437, %v2198
        %2556 = vst.msk [vmem:[%s299 + $0xd8] sm:$0xff] %vm437, %v2200
        %2557 = vst.msk [vmem:[%s299 + $0xe0] sm:$0xff] %vm437, %v2202
        %2558 = vst.msk [vmem:[%s299 + $0xe8] sm:$0xff] %vm437, %v2204
        %2559 = vst.msk [vmem:[%s299 + $0xf0] sm:$0xff] %vm437, %v2206
        %2560 = vst.msk [vmem:[%s299 + $0xf8] sm:$0xff] %vm437, %v2208
        %2561 = vst.msk [vmem:[%s299 + $0x100] sm:$0xff] %vm437, %v2210
        %2562 = vst.msk [vmem:[%s299 + $0x108] sm:$0xff] %vm437, %v2212
        %2563 = vst.msk [vmem:[%s299 + $0x110] sm:$0xff] %vm437, %v2214
        %2564 = vst.msk [vmem:[%s299 + $0x118] sm:$0xff] %vm437, %v2216
        %2565 = vst.msk [vmem:[%s299 + $0x120] sm:$0xff] %vm437, %v2218
        %2566 = vst.msk [vmem:[%s299 + $0x128] sm:$0xff] %vm437, %v2220
        %2567 = vst.msk [vmem:[%s299 + $0x130] sm:$0xff] %vm437, %v2222
        %2568 = vst.msk [vmem:[%s299 + $0x138] sm:$0xff] %vm437, %v2224
        %2569 = vst.msk [vmem:[%s299 + $0x140] sm:$0xff] %vm437, %v2226
        %2570 = vst.msk [vmem:[%s299 + $0x148] sm:$0xff] %vm437, %v2228
        %2571 = vst.msk [vmem:[%s299 + $0x150] sm:$0xff] %vm437, %v2230
        %2572 = vst.msk [vmem:[%s299 + $0x158] sm:$0xff] %vm437, %v2232
        %2573 = vst.msk [vmem:[%s299 + $0x160] sm:$0xff] %vm437, %v2234
        %2574 = vst.msk [vmem:[%s299 + $0x168] sm:$0xff] %vm437, %v2236
        %2575 = vst.msk [vmem:[%s299 + $0x170] sm:$0xff] %vm437, %v2238
        %2576 = vst.msk [vmem:[%s299 + $0x178] sm:$0xff] %vm437, %v2240
        %2577 = vst.msk [vmem:[%s299 + $0x180] sm:$0xff] %vm437, %v2242
        %2578 = vst.msk [vmem:[%s299 + $0x188] sm:$0xff] %vm437, %v2244
        %2579 = vst.msk [vmem:[%s299 + $0x190] sm:$0xff] %vm437, %v2246
        %2580 = vst.msk [vmem:[%s299 + $0x198] sm:$0xff] %vm437, %v2248
        %2581 = vst.msk [vmem:[%s299 + $0x1a0] sm:$0xff] %vm437, %v2250
        %2582 = vst.msk [vmem:[%s299 + $0x1a8] sm:$0xff] %vm437, %v2252
        %2583 = vst.msk [vmem:[%s299 + $0x1b0] sm:$0xff] %vm437, %v2254
        %2584 = vst.msk [vmem:[%s299 + $0x1b8] sm:$0xff] %vm437, %v2256
        %2585 = vst.msk [vmem:[%s299 + $0x1c0] sm:$0xff] %vm437, %v2258
        %2586 = vst.msk [vmem:[%s299 + $0x1c8] sm:$0xff] %vm437, %v2260
        %2587 = vst.msk [vmem:[%s299 + $0x1d0] sm:$0xff] %vm437, %v2262
        %2588 = vst.msk [vmem:[%s299 + $0x1d8] sm:$0xff] %vm437, %v2264
        %2589 = vst.msk [vmem:[%s299 + $0x1e0] sm:$0xff] %vm437, %v2266
        %2590 = vst.msk [vmem:[%s299 + $0x1e8] sm:$0xff] %vm437, %v2268
        %2591 = vst.msk [vmem:[%s299 + $0x1f0] sm:$0xff] %vm437, %v2270
        %2592 = vst.msk [vmem:[%s299 + $0x1f8] sm:$0xff] %vm437, %v2272
        %2593 = vst.msk [vmem:[%s299 + $0x200] sm:$0xff] %vm437, %v2274
        %2594 = vst.msk [vmem:[%s299 + $0x208] sm:$0xff] %vm437, %v2276
        %2595 = vst.msk [vmem:[%s299 + $0x210] sm:$0xff] %vm437, %v2278
        %2596 = vst.msk [vmem:[%s299 + $0x218] sm:$0xff] %vm437, %v2280
        %2597 = vst.msk [vmem:[%s299 + $0x220] sm:$0xff] %vm437, %v2282
        %2598 = vst.msk [vmem:[%s299 + $0x228] sm:$0xff] %vm437, %v2284
        %2599 = vst.msk [vmem:[%s299 + $0x230] sm:$0xff] %vm437, %v2286
        %2600 = vst.msk [vmem:[%s299 + $0x238] sm:$0xff] %vm437, %v2288
        %2601 = vst.msk [vmem:[%s299 + $0x240] sm:$0xff] %vm437, %v2290
        %2602 = vst.msk [vmem:[%s299 + $0x248] sm:$0xff] %vm437, %v2292
        %2603 = vst.msk [vmem:[%s299 + $0x250] sm:$0xff] %vm437, %v2294
        %2604 = vst.msk [vmem:[%s299 + $0x258] sm:$0xff] %vm437, %v2296
        %2605 = vst.msk [vmem:[%s299 + $0x260] sm:$0xff] %vm437, %v2298
        %2606 = vst.msk [vmem:[%s299 + $0x268] sm:$0xff] %vm437, %v2300
        %2607 = vst.msk [vmem:[%s299 + $0x270] sm:$0xff] %vm437, %v2302
        %2608 = vst.msk [vmem:[%s299 + $0x278] sm:$0xff] %vm437, %v2304
        %2609 = vst.msk [vmem:[%s299 + $0x280] sm:$0xff] %vm437, %v2306
        %2610 = vst.msk [vmem:[%s299 + $0x288] sm:$0xff] %vm437, %v2308
        %2611 = vst.msk [vmem:[%s299 + $0x290] sm:$0xff] %vm437, %v2310
        %2612 = vst.msk [vmem:[%s299 + $0x298] sm:$0xff] %vm437, %v2312
        %2613 = vst.msk [vmem:[%s299 + $0x2a0] sm:$0xff] %vm437, %v2314
        %2614 = vst.msk [vmem:[%s299 + $0x2a8] sm:$0xff] %vm437, %v2316
        %2615 = vst.msk [vmem:[%s299 + $0x2b0] sm:$0xff] %vm437, %v2318
        %2616 = vst.msk [vmem:[%s299 + $0x2b8] sm:$0xff] %vm437, %v2320
        %2617 = vst.msk [vmem:[%s299 + $0x2c0] sm:$0xff] %vm437, %v2322
        %2618 = vst.msk [vmem:[%s299 + $0x2c8] sm:$0xff] %vm437, %v2324
        %2619 = vst.msk [vmem:[%s299 + $0x2d0] sm:$0xff] %vm437, %v2326
        %2620 = vst.msk [vmem:[%s299 + $0x2d8] sm:$0xff] %vm437, %v2328
        %2621 = vst.msk [vmem:[%s299 + $0x2e0] sm:$0xff] %vm437, %v2330
        %2622 = vst.msk [vmem:[%s299 + $0x2e8] sm:$0xff] %vm437, %v2332
        %2623 = vst.msk [vmem:[%s299 + $0x2f0] sm:$0xff] %vm437, %v2334
        %2624 = vst.msk [vmem:[%s299 + $0x2f8] sm:$0xff] %vm437, %v2336
        %2625 = vst.msk [vmem:[%s299 + $0x300] sm:$0xff] %vm437, %v2338
        %2626 = vst.msk [vmem:[%s299 + $0x308] sm:$0xff] %vm437, %v2340
        %2627 = vst.msk [vmem:[%s299 + $0x310] sm:$0xff] %vm437, %v2342
        %2628 = vst.msk [vmem:[%s299 + $0x318] sm:$0xff] %vm437, %v2344
        %2629 = vst.msk [vmem:[%s299 + $0x320] sm:$0xff] %vm437, %v2346
        %2630 = vst.msk [vmem:[%s299 + $0x328] sm:$0xff] %vm437, %v2348
        %2631 = vst.msk [vmem:[%s299 + $0x330] sm:$0xff] %vm437, %v2350
        %2632 = vst.msk [vmem:[%s299 + $0x338] sm:$0xff] %vm437, %v2352
        %2633 = vst.msk [vmem:[%s299 + $0x340] sm:$0xff] %vm437, %v2354
        %2634 = vst.msk [vmem:[%s299 + $0x348] sm:$0xff] %vm437, %v2356
        %2635 = vst.msk [vmem:[%s299 + $0x350] sm:$0xff] %vm437, %v2358
        %2636 = vst.msk [vmem:[%s299 + $0x358] sm:$0xff] %vm437, %v2360
        %2637 = vst.msk [vmem:[%s299 + $0x360] sm:$0xff] %vm437, %v2362
        %2638 = vst.msk [vmem:[%s299 + $0x368] sm:$0xff] %vm437, %v2364
        %2639 = vst.msk [vmem:[%s299 + $0x370] sm:$0xff] %vm437, %v2366
        %2640 = vst.msk [vmem:[%s299 + $0x378] sm:$0xff] %vm437, %v2368
        %2641 = vst.msk [vmem:[%s299 + $0x380] sm:$0xff] %vm437, %v2370
        %2642 = vst.msk [vmem:[%s299 + $0x388] sm:$0xff] %vm437, %v2372
        %2643 = vst.msk [vmem:[%s299 + $0x390] sm:$0xff] %vm437, %v2374
        %2644 = vst.msk [vmem:[%s299 + $0x398] sm:$0xff] %vm437, %v2376
        %2645 = vst.msk [vmem:[%s299 + $0x3a0] sm:$0xff] %vm437, %v2378
        %2646 = vst.msk [vmem:[%s299 + $0x3a8] sm:$0xff] %vm437, %v2380
        %2647 = vst.msk [vmem:[%s299 + $0x3b0] sm:$0xff] %vm437, %v2382
        %2648 = vst.msk [vmem:[%s299 + $0x3b8] sm:$0xff] %vm437, %v2384
        %2649 = vst.msk [vmem:[%s299 + $0x3c0] sm:$0xff] %vm437, %v2386
        %2650 = vst.msk [vmem:[%s299 + $0x3c8] sm:$0xff] %vm437, %v2388
        %2651 = vst.msk [vmem:[%s299 + $0x3d0] sm:$0xff] %vm437, %v2390
        %2652 = vst.msk [vmem:[%s299 + $0x3d8] sm:$0xff] %vm437, %v2392
        %2653 = vst.msk [vmem:[%s299 + $0x3e0] sm:$0xff] %vm437, %v2394
        %2654 = vst.msk [vmem:[%s299 + $0x3e8] sm:$0xff] %vm437, %v2396
        %2655 = vst.msk [vmem:[%s299 + $0x3f0] sm:$0xff] %vm437, %v2398
        %2656 = vst.msk [vmem:[%s299 + $0x3f8] sm:$0xff] %vm437, %v2400
        %s2657 = smul.u32 128, %s25
        %p2658 = scmp.lt.s32.totalorder %s24, 1
        %s2659 = scalar_select %p2658, %s24, 1
        %p2660 = scmp.lt.s32.totalorder %s2657, 127
        %s2661 = scalar_select %p2660, %s2657, 127
        %s2662 = smul.addr %s2659, 128
        %s2663 = sadd.s32 %s2661, %s2662
        %s2664 = smul.addr %s2663, 8
        %s2665 = scalar_lea.vmem %s3, %s2664
        %s2666 = sand.u32 %s140, 1
        %s2667 = scalar_lea.sflag [#allocation3], %s2666
        %s2668 = sand.u32 %s140, 1
        %s2669 = smul.addr %s2668, 32
        %s2670 = scalar_lea.vmem [#allocation2], %s2669
        %s2671 = smul.u32 128, %s25
        %p2672 = scmp.lt.s32.totalorder %s24, 1
        %s2673 = scalar_select %p2672, %s24, 1
        %p2674 = scmp.lt.s32.totalorder %s2671, 127
        %s2675 = scalar_select %p2674, %s2671, 127
        %s2676 = smul.addr %s2673, 128
        %s2677 = sadd.s32 %s2675, %s2676
        %s2678 = smul.addr %s2677, 8
        %s2679 = scalar_lea.vmem %s5, %s2678
        // Predicated region
        $region33: #{tpu_custom_call.1} parent=31 // pred_check
          %p2680 = pneg %p122
        $region34: #{tpu_custom_call.1} parent=31 // pred_check_branch
          %2682 = sbr.rel (%p2680) target = $region36
        $region35: #{tpu_custom_call.1} parent=31 // pred_region
          %s2683 = smul.u32 128, %s25
        $region36: #{tpu_custom_call.1} parent=31 // pred_fallthru
          _
        // Predicated region
        $region37: #{tpu_custom_call.1} parent=31 // pred_check
          %p2684 = pneg %p150
        $region38: #{tpu_custom_call.1} parent=31 // pred_check_branch
          %2686 = sbr.rel (%p2684) target = $region40
        $region39: #{tpu_custom_call.1} parent=31 // pred_region
          %s2687 = smul.u32 8, %s25
          %2689 = vsyncadd %s2667, 0
          %s2690 = smul.addr %s24, 8
          %s2691 = sadd.s32 %s2687, %s2690
          %s2692 = smul.addr %s2691, 4
          %s2693 = scalar_lea.hbm %s4, %s2692
          %s2695 = sshll.u32 %s2670, 4
          %s2696 = int_to_ptr.vmem [resolvable:$true] %s2695
          %s2697 = sshll.u32 %s2693, 4
          %s2698 = int_to_ptr.hbm [resolvable:$true] %s2697
          %2700 = dma.vmem_to_hbm [thread:$0]  %s2696, 512, %s2698, %s2667
        $region40: #{tpu_custom_call.1} parent=31 // pred_fallthru
          _
        // Predicated region
        $region41: #{tpu_custom_call.1} parent=31 // pred_check
          %p2701 = pneg %p178
        $region42: #{tpu_custom_call.1} parent=31 // pred_check_branch
          %2703 = sbr.rel (%p2701) target = $region44
        $region43: #{tpu_custom_call.1} parent=31 // pred_region
          %s2704 = smul.u32 128, %s25
        $region44: #{tpu_custom_call.1} parent=31 // pred_fallthru
          _
      $region32: #{tpu_custom_call.1} parent=5 // pred_fallthru
        _
      %p2705 = scmp.le.s32.totalorder 2, %s15
      // Predicated region
      $region45: #{tpu_custom_call.1} parent=5 // pred_check
        %p2706 = pneg %p2705
      $region46: #{tpu_custom_call.1} parent=5 // pred_check_branch
        %2708 = sbr.rel (%p2706) target = $region48
      $region47: #{tpu_custom_call.1} parent=5 // pred_region
        %s2709 = ssub.s32 %s15, 2
        // Predicated region
        $region49: #{tpu_custom_call.1} parent=47 // pred_check
          %p2710 = pneg %p128
        $region50: #{tpu_custom_call.1} parent=47 // pred_check_branch
          %2712 = sbr.rel (%p2710) target = $region52
        $region51: #{tpu_custom_call.1} parent=47 // pred_region
          %s2713 = smul.u32 128, %s27
          %p2714 = scmp.lt.s32.totalorder %s26, 1
          %s2715 = scalar_select %p2714, %s26, 1
          %p2716 = scmp.lt.s32.totalorder %s2713, 127
          %s2717 = scalar_select %p2716, %s2713, 127
          %s2718 = smul.addr %s2715, 128
          %s2719 = sadd.s32 %s2717, %s2718
          %s2720 = smul.addr %s2719, 8
          %s2721 = scalar_lea.vmem %s3, %s2720
        $region52: #{tpu_custom_call.1} parent=47 // pred_fallthru
          _
        // Predicated region
        $region53: #{tpu_custom_call.1} parent=47 // pred_check
          %p2722 = pneg %p156
        $region54: #{tpu_custom_call.1} parent=47 // pred_check_branch
          %2724 = sbr.rel (%p2722) target = $region56
        $region55: #{tpu_custom_call.1} parent=47 // pred_region
          %s2725 = sand.u32 %s141, 1
          %s2726 = scalar_lea.sflag [#allocation3], %s2725
          %s2727 = sand.u32 %s141, 1
          %s2728 = smul.addr %s2727, 32
          %s2729 = scalar_lea.vmem [#allocation2], %s2728
          %2731 = dma.done %s2726, 512
        $region56: #{tpu_custom_call.1} parent=47 // pred_fallthru
          _
        // Predicated region
        $region57: #{tpu_custom_call.1} parent=47 // pred_check
          %p2732 = pneg %p184
        $region58: #{tpu_custom_call.1} parent=47 // pred_check_branch
          %2734 = sbr.rel (%p2732) target = $region60
        $region59: #{tpu_custom_call.1} parent=47 // pred_region
          %s2735 = smul.u32 128, %s27
          %p2736 = scmp.lt.s32.totalorder %s26, 1
          %s2737 = scalar_select %p2736, %s26, 1
          %p2738 = scmp.lt.s32.totalorder %s2735, 127
          %s2739 = scalar_select %p2738, %s2735, 127
          %s2740 = smul.addr %s2737, 128
          %s2741 = sadd.s32 %s2739, %s2740
          %s2742 = smul.addr %s2741, 8
          %s2743 = scalar_lea.vmem %s5, %s2742
        $region60: #{tpu_custom_call.1} parent=47 // pred_fallthru
          _
      $region48: #{tpu_custom_call.1} parent=5 // pred_fallthru
        _
    $region6: #{tpu_custom_call.1} parent=1 // loop_footer
      %s19 = sadd.s32 1, %s15
    $region7: #{tpu_custom_call.1} parent=1 // loop_footer_branch
      %14 = sbr.rel target = $region3
    $region8: #{tpu_custom_call.1} parent=1 // loop_exit
      _
    %2744 = vsyncpa [#allocation3], 1
    %s2745 = scalar_lea.sflag [#allocation3], 1
    %2746 = vsyncpa %s2745, 1

</llo_original>
